<compile_context>
chip_gen: v5e
topology: v5e:2x2
jax: 0.10.0
libtpu: 0.0.40
codegen_flags: <defaults>
</compile_context>

<pallas_src>
import jax
import jax.numpy as jnp
from jax.experimental import pallas as pl
from jax.experimental.pallas import tpu as pltpu


def _sigmoid(v):
    # Explicit form; lowers to EUP exp + VPU ops.
    return 1.0 / (1.0 + jnp.exp(-v))


def _make_kernel(C, H, W):
    def kernel(x_ref, w12_ref, b12_ref, w3_ref, b3_ref, o_ref):
        # x_ref: (1, C, H, W) VMEM block; weights/biases are SMEM scalars.
        x_planes = [x_ref[0, c] for c in range(C)]          # C x (H, W) f32

        # ---- fused conv1/conv2 (1x1) + sigmoid: scalar-plane FMAs (VPU) ----
        y12 = []
        for o in range(2 * C):
            acc = w12_ref[o, 0] * x_planes[0]
            for c in range(1, C):
                acc = acc + w12_ref[o, c] * x_planes[c]
            y12.append(_sigmoid(acc + b12_ref[o]))
        x1 = y12[:C]      # sigmoid(conv1(x)) per channel, (H, W)
        x2 = y12[C:]      # sigmoid(conv2(x)) per channel, (H, W)

        # ---- spatial attention per channel (MXU) ---------------------------
        #   x3[c] = x1[c]^T @ x2[c]   (W, W)
        #   x4[c] = x[c]   @ x3[c]    (H, W)
        x4 = []
        for c in range(C):
            x3c = jnp.dot(x1[c].T, x2[c], preferred_element_type=jnp.float32)
            x4.append(jnp.dot(x_planes[c], x3c,
                              preferred_element_type=jnp.float32))

        # ---- conv3 (1x1) + sigmoid, store -----------------------------------
        for o in range(C):
            acc = w3_ref[o, 0] * x4[0]
            for c in range(1, C):
                acc = acc + w3_ref[o, c] * x4[c]
            o_ref[0, o] = _sigmoid(acc + b3_ref[o])

    return kernel


def self_attention(x, w1, b1, w2, b2, w3, b3):
    B, C, H, W = x.shape
    x = x.astype(jnp.float32)
    w12 = jnp.concatenate([w1, w2], axis=0).astype(jnp.float32)   # (2C, C)
    b12 = jnp.concatenate([b1, b2], axis=0).astype(jnp.float32)   # (2C,)
    w3 = w3.astype(jnp.float32)
    b3 = b3.astype(jnp.float32)

    kernel = _make_kernel(C, H, W)
    smem = pl.BlockSpec(memory_space=pltpu.MemorySpace.SMEM)

    out = pl.pallas_call(
        kernel,
        out_shape=jax.ShapeDtypeStruct((B, C, H, W), jnp.float32),
        grid=(B,),
        in_specs=[
            pl.BlockSpec((1, C, H, W), lambda b: (b, 0, 0, 0)),   # x (NCHW)
            smem,                                                 # w12 (2C, C)
            smem,                                                 # b12 (2C,)
            smem,                                                 # w3  (C, C)
            smem,                                                 # b3  (C,)
        ],
        out_specs=pl.BlockSpec((1, C, H, W), lambda b: (b, 0, 0, 0)),
        compiler_params=pltpu.CompilerParams(
            dimension_semantics=("parallel",)),
    )(x, w12, b12, w3, b3)
    return out


def _reference(x, w1, b1, w2, b2, w3, b3):
    # Pure-JAX reference mirroring the PyTorch forward (highest precision so
    # the f32 comparison against the kernel is meaningful on TPU).
    hp = jax.lax.Precision.HIGHEST

    def conv1x1(t, w, b):
        return (jnp.einsum("oc,bchw->bohw", w, t, precision=hp)
                + b[None, :, None, None])

    x1 = jax.nn.sigmoid(conv1x1(x, w1, b1))
    x1 = jnp.swapaxes(x1, 2, 3)                      # (B,C,W,H)
    x2 = jax.nn.sigmoid(conv1x1(x, w2, b2))          # (B,C,H,W)
    x3 = jnp.matmul(x1, x2, precision=hp)            # (B,C,W,W)
    x4 = jnp.matmul(x, x3, precision=hp)             # (B,C,H,W)
    return jax.nn.sigmoid(conv1x1(x4, w3, b3))


if __name__ == "__main__":
    B, C, H, W = 2, 4, 16, 16
    key = jax.random.PRNGKey(0)
    kx, k1, k2, k3, k4, k5, k6 = jax.random.split(key, 7)

    x = jax.random.normal(kx, (B, C, H, W), dtype=jnp.float32)
    # A 1x1 conv == (C,C) matrix + bias.
    scale = 1.0 / jnp.sqrt(jnp.float32(C))
    w1 = jax.random.normal(k1, (C, C), dtype=jnp.float32) * scale
    b1 = jax.random.normal(k2, (C,), dtype=jnp.float32) * 0.1
    w2 = jax.random.normal(k3, (C, C), dtype=jnp.float32) * scale
    b2 = jax.random.normal(k4, (C,), dtype=jnp.float32) * 0.1
    w3 = jax.random.normal(k5, (C, C), dtype=jnp.float32) * scale
    b3 = jax.random.normal(k6, (C,), dtype=jnp.float32) * 0.1

    out = self_attention(x, w1, b1, w2, b2, w3, b3)
    out = jax.block_until_ready(out)

    ref = _reference(x, w1, b1, w2, b2, w3, b3)
    assert out.shape == (B, C, H, W)
    assert jnp.allclose(out, ref, atol=1e-4, rtol=1e-4), "mismatch vs reference"

    print("KERNEL_OK")
</pallas_src>

<mosaic_0001>
module attributes {stable_mosaic.version = 11 : i64} {
  func.func @kernel(%arg0: i32, %arg1: memref<1x4x16x16xf32, #tpu.memory_space<vmem>>, %arg2: memref<8x4xf32, #tpu.memory_space<smem>>, %arg3: memref<8xf32, #tpu.memory_space<smem>>, %arg4: memref<4x4xf32, #tpu.memory_space<smem>>, %arg5: memref<4xf32, #tpu.memory_space<smem>>, %arg6: memref<1x4x16x16xf32, #tpu.memory_space<vmem>>) attributes {dimension_semantics = [#tpu.dimension_semantics<parallel>], iteration_bounds = array<i64: 2>, scalar_prefetch = 0 : i64, scratch_operands = 0 : i64, tpu.core_type = #tpu.core_type<tc>, window_params = [{transform_indices = @transform_0, window_bounds = array<i64: 1, 4, 16, 16>}, {transform_indices = @transform_1, window_bounds = array<i64: 8, 4>}, {transform_indices = @transform_2, window_bounds = array<i64: 8>}, {transform_indices = @transform_3, window_bounds = array<i64: 4, 4>}, {transform_indices = @transform_4, window_bounds = array<i64: 4>}, {transform_indices = @transform_5, window_bounds = array<i64: 1, 4, 16, 16>}]} {
    %c0 = arith.constant 0 : index
    %c0_0 = arith.constant 0 : index
    %c0_1 = arith.constant 0 : index
    %c0_2 = arith.constant 0 : index
    %0 = vector.load %arg1[%c0, %c0_0, %c0_1, %c0_2] : memref<1x4x16x16xf32, #tpu.memory_space<vmem>>, vector<1x1x16x16xf32>
    %1 = vector.shape_cast %0 : vector<1x1x16x16xf32> to vector<16x16xf32>
    %c0_3 = arith.constant 0 : index
    %c1 = arith.constant 1 : index
    %c0_4 = arith.constant 0 : index
    %c0_5 = arith.constant 0 : index
    %2 = vector.load %arg1[%c0_3, %c1, %c0_4, %c0_5] : memref<1x4x16x16xf32, #tpu.memory_space<vmem>>, vector<1x1x16x16xf32>
    %3 = vector.shape_cast %2 : vector<1x1x16x16xf32> to vector<16x16xf32>
    %c0_6 = arith.constant 0 : index
    %c2 = arith.constant 2 : index
    %c0_7 = arith.constant 0 : index
    %c0_8 = arith.constant 0 : index
    %4 = vector.load %arg1[%c0_6, %c2, %c0_7, %c0_8] : memref<1x4x16x16xf32, #tpu.memory_space<vmem>>, vector<1x1x16x16xf32>
    %5 = vector.shape_cast %4 : vector<1x1x16x16xf32> to vector<16x16xf32>
    %c0_9 = arith.constant 0 : index
    %c3 = arith.constant 3 : index
    %c0_10 = arith.constant 0 : index
    %c0_11 = arith.constant 0 : index
    %6 = vector.load %arg1[%c0_9, %c3, %c0_10, %c0_11] : memref<1x4x16x16xf32, #tpu.memory_space<vmem>>, vector<1x1x16x16xf32>
    %7 = vector.shape_cast %6 : vector<1x1x16x16xf32> to vector<16x16xf32>
    %c0_12 = arith.constant 0 : index
    %c0_13 = arith.constant 0 : index
    %8 = memref.load %arg2[%c0_12, %c0_13] : memref<8x4xf32, #tpu.memory_space<smem>>
    %9 = vector.broadcast %8 : f32 to vector<16x16xf32>
    %10 = arith.mulf %9, %1 : vector<16x16xf32>
    %c0_14 = arith.constant 0 : index
    %c1_15 = arith.constant 1 : index
    %11 = memref.load %arg2[%c0_14, %c1_15] : memref<8x4xf32, #tpu.memory_space<smem>>
    %12 = vector.broadcast %11 : f32 to vector<16x16xf32>
    %13 = arith.mulf %12, %3 : vector<16x16xf32>
    %14 = arith.addf %10, %13 : vector<16x16xf32>
    %c0_16 = arith.constant 0 : index
    %c2_17 = arith.constant 2 : index
    %15 = memref.load %arg2[%c0_16, %c2_17] : memref<8x4xf32, #tpu.memory_space<smem>>
    %16 = vector.broadcast %15 : f32 to vector<16x16xf32>
    %17 = arith.mulf %16, %5 : vector<16x16xf32>
    %18 = arith.addf %14, %17 : vector<16x16xf32>
    %c0_18 = arith.constant 0 : index
    %c3_19 = arith.constant 3 : index
    %19 = memref.load %arg2[%c0_18, %c3_19] : memref<8x4xf32, #tpu.memory_space<smem>>
    %20 = vector.broadcast %19 : f32 to vector<16x16xf32>
    %21 = arith.mulf %20, %7 : vector<16x16xf32>
    %22 = arith.addf %18, %21 : vector<16x16xf32>
    %c0_20 = arith.constant 0 : index
    %23 = memref.load %arg3[%c0_20] : memref<8xf32, #tpu.memory_space<smem>>
    %24 = vector.broadcast %23 : f32 to vector<16x16xf32>
    %25 = arith.addf %22, %24 : vector<16x16xf32>
    %cst = arith.constant 0.000000e+00 : f32
    %26 = vector.broadcast %cst : f32 to vector<16x16xf32>
    %27 = arith.subf %26, %25 : vector<16x16xf32>
    %28 = math.exp %27 : vector<16x16xf32>
    %cst_21 = arith.constant 1.000000e+00 : f32
    %29 = vector.broadcast %cst_21 : f32 to vector<16x16xf32>
    %30 = arith.addf %29, %28 : vector<16x16xf32>
    %cst_22 = arith.constant 1.000000e+00 : f32
    %31 = vector.broadcast %cst_22 : f32 to vector<16x16xf32>
    %32 = arith.divf %31, %30 : vector<16x16xf32>
    %c1_23 = arith.constant 1 : index
    %c0_24 = arith.constant 0 : index
    %33 = memref.load %arg2[%c1_23, %c0_24] : memref<8x4xf32, #tpu.memory_space<smem>>
    %34 = vector.broadcast %33 : f32 to vector<16x16xf32>
    %35 = arith.mulf %34, %1 : vector<16x16xf32>
    %c1_25 = arith.constant 1 : index
    %c1_26 = arith.constant 1 : index
    %36 = memref.load %arg2[%c1_25, %c1_26] : memref<8x4xf32, #tpu.memory_space<smem>>
    %37 = vector.broadcast %36 : f32 to vector<16x16xf32>
    %38 = arith.mulf %37, %3 : vector<16x16xf32>
    %39 = arith.addf %35, %38 : vector<16x16xf32>
    %c1_27 = arith.constant 1 : index
    %c2_28 = arith.constant 2 : index
    %40 = memref.load %arg2[%c1_27, %c2_28] : memref<8x4xf32, #tpu.memory_space<smem>>
    %41 = vector.broadcast %40 : f32 to vector<16x16xf32>
    %42 = arith.mulf %41, %5 : vector<16x16xf32>
    %43 = arith.addf %39, %42 : vector<16x16xf32>
    %c1_29 = arith.constant 1 : index
    %c3_30 = arith.constant 3 : index
    %44 = memref.load %arg2[%c1_29, %c3_30] : memref<8x4xf32, #tpu.memory_space<smem>>
    %45 = vector.broadcast %44 : f32 to vector<16x16xf32>
    %46 = arith.mulf %45, %7 : vector<16x16xf32>
    %47 = arith.addf %43, %46 : vector<16x16xf32>
    %c1_31 = arith.constant 1 : index
    %48 = memref.load %arg3[%c1_31] : memref<8xf32, #tpu.memory_space<smem>>
    %49 = vector.broadcast %48 : f32 to vector<16x16xf32>
    %50 = arith.addf %47, %49 : vector<16x16xf32>
    %cst_32 = arith.constant 0.000000e+00 : f32
    %51 = vector.broadcast %cst_32 : f32 to vector<16x16xf32>
    %52 = arith.subf %51, %50 : vector<16x16xf32>
    %53 = math.exp %52 : vector<16x16xf32>
    %cst_33 = arith.constant 1.000000e+00 : f32
    %54 = vector.broadcast %cst_33 : f32 to vector<16x16xf32>
    %55 = arith.addf %54, %53 : vector<16x16xf32>
    %cst_34 = arith.constant 1.000000e+00 : f32
    %56 = vector.broadcast %cst_34 : f32 to vector<16x16xf32>
    %57 = arith.divf %56, %55 : vector<16x16xf32>
    %c2_35 = arith.constant 2 : index
    %c0_36 = arith.constant 0 : index
    %58 = memref.load %arg2[%c2_35, %c0_36] : memref<8x4xf32, #tpu.memory_space<smem>>
    %59 = vector.broadcast %58 : f32 to vector<16x16xf32>
    %60 = arith.mulf %59, %1 : vector<16x16xf32>
    %c2_37 = arith.constant 2 : index
    %c1_38 = arith.constant 1 : index
    %61 = memref.load %arg2[%c2_37, %c1_38] : memref<8x4xf32, #tpu.memory_space<smem>>
    %62 = vector.broadcast %61 : f32 to vector<16x16xf32>
    %63 = arith.mulf %62, %3 : vector<16x16xf32>
    %64 = arith.addf %60, %63 : vector<16x16xf32>
    %c2_39 = arith.constant 2 : index
    %c2_40 = arith.constant 2 : index
    %65 = memref.load %arg2[%c2_39, %c2_40] : memref<8x4xf32, #tpu.memory_space<smem>>
    %66 = vector.broadcast %65 : f32 to vector<16x16xf32>
    %67 = arith.mulf %66, %5 : vector<16x16xf32>
    %68 = arith.addf %64, %67 : vector<16x16xf32>
    %c2_41 = arith.constant 2 : index
    %c3_42 = arith.constant 3 : index
    %69 = memref.load %arg2[%c2_41, %c3_42] : memref<8x4xf32, #tpu.memory_space<smem>>
    %70 = vector.broadcast %69 : f32 to vector<16x16xf32>
    %71 = arith.mulf %70, %7 : vector<16x16xf32>
    %72 = arith.addf %68, %71 : vector<16x16xf32>
    %c2_43 = arith.constant 2 : index
    %73 = memref.load %arg3[%c2_43] : memref<8xf32, #tpu.memory_space<smem>>
    %74 = vector.broadcast %73 : f32 to vector<16x16xf32>
    %75 = arith.addf %72, %74 : vector<16x16xf32>
    %cst_44 = arith.constant 0.000000e+00 : f32
    %76 = vector.broadcast %cst_44 : f32 to vector<16x16xf32>
    %77 = arith.subf %76, %75 : vector<16x16xf32>
    %78 = math.exp %77 : vector<16x16xf32>
    %cst_45 = arith.constant 1.000000e+00 : f32
    %79 = vector.broadcast %cst_45 : f32 to vector<16x16xf32>
    %80 = arith.addf %79, %78 : vector<16x16xf32>
    %cst_46 = arith.constant 1.000000e+00 : f32
    %81 = vector.broadcast %cst_46 : f32 to vector<16x16xf32>
    %82 = arith.divf %81, %80 : vector<16x16xf32>
    %c3_47 = arith.constant 3 : index
    %c0_48 = arith.constant 0 : index
    %83 = memref.load %arg2[%c3_47, %c0_48] : memref<8x4xf32, #tpu.memory_space<smem>>
    %84 = vector.broadcast %83 : f32 to vector<16x16xf32>
    %85 = arith.mulf %84, %1 : vector<16x16xf32>
    %c3_49 = arith.constant 3 : index
    %c1_50 = arith.constant 1 : index
    %86 = memref.load %arg2[%c3_49, %c1_50] : memref<8x4xf32, #tpu.memory_space<smem>>
    %87 = vector.broadcast %86 : f32 to vector<16x16xf32>
    %88 = arith.mulf %87, %3 : vector<16x16xf32>
    %89 = arith.addf %85, %88 : vector<16x16xf32>
    %c3_51 = arith.constant 3 : index
    %c2_52 = arith.constant 2 : index
    %90 = memref.load %arg2[%c3_51, %c2_52] : memref<8x4xf32, #tpu.memory_space<smem>>
    %91 = vector.broadcast %90 : f32 to vector<16x16xf32>
    %92 = arith.mulf %91, %5 : vector<16x16xf32>
    %93 = arith.addf %89, %92 : vector<16x16xf32>
    %c3_53 = arith.constant 3 : index
    %c3_54 = arith.constant 3 : index
    %94 = memref.load %arg2[%c3_53, %c3_54] : memref<8x4xf32, #tpu.memory_space<smem>>
    %95 = vector.broadcast %94 : f32 to vector<16x16xf32>
    %96 = arith.mulf %95, %7 : vector<16x16xf32>
    %97 = arith.addf %93, %96 : vector<16x16xf32>
    %c3_55 = arith.constant 3 : index
    %98 = memref.load %arg3[%c3_55] : memref<8xf32, #tpu.memory_space<smem>>
    %99 = vector.broadcast %98 : f32 to vector<16x16xf32>
    %100 = arith.addf %97, %99 : vector<16x16xf32>
    %cst_56 = arith.constant 0.000000e+00 : f32
    %101 = vector.broadcast %cst_56 : f32 to vector<16x16xf32>
    %102 = arith.subf %101, %100 : vector<16x16xf32>
    %103 = math.exp %102 : vector<16x16xf32>
    %cst_57 = arith.constant 1.000000e+00 : f32
    %104 = vector.broadcast %cst_57 : f32 to vector<16x16xf32>
    %105 = arith.addf %104, %103 : vector<16x16xf32>
    %cst_58 = arith.constant 1.000000e+00 : f32
    %106 = vector.broadcast %cst_58 : f32 to vector<16x16xf32>
    %107 = arith.divf %106, %105 : vector<16x16xf32>
    %c4 = arith.constant 4 : index
    %c0_59 = arith.constant 0 : index
    %108 = memref.load %arg2[%c4, %c0_59] : memref<8x4xf32, #tpu.memory_space<smem>>
    %109 = vector.broadcast %108 : f32 to vector<16x16xf32>
    %110 = arith.mulf %109, %1 : vector<16x16xf32>
    %c4_60 = arith.constant 4 : index
    %c1_61 = arith.constant 1 : index
    %111 = memref.load %arg2[%c4_60, %c1_61] : memref<8x4xf32, #tpu.memory_space<smem>>
    %112 = vector.broadcast %111 : f32 to vector<16x16xf32>
    %113 = arith.mulf %112, %3 : vector<16x16xf32>
    %114 = arith.addf %110, %113 : vector<16x16xf32>
    %c4_62 = arith.constant 4 : index
    %c2_63 = arith.constant 2 : index
    %115 = memref.load %arg2[%c4_62, %c2_63] : memref<8x4xf32, #tpu.memory_space<smem>>
    %116 = vector.broadcast %115 : f32 to vector<16x16xf32>
    %117 = arith.mulf %116, %5 : vector<16x16xf32>
    %118 = arith.addf %114, %117 : vector<16x16xf32>
    %c4_64 = arith.constant 4 : index
    %c3_65 = arith.constant 3 : index
    %119 = memref.load %arg2[%c4_64, %c3_65] : memref<8x4xf32, #tpu.memory_space<smem>>
    %120 = vector.broadcast %119 : f32 to vector<16x16xf32>
    %121 = arith.mulf %120, %7 : vector<16x16xf32>
    %122 = arith.addf %118, %121 : vector<16x16xf32>
    %c4_66 = arith.constant 4 : index
    %123 = memref.load %arg3[%c4_66] : memref<8xf32, #tpu.memory_space<smem>>
    %124 = vector.broadcast %123 : f32 to vector<16x16xf32>
    %125 = arith.addf %122, %124 : vector<16x16xf32>
    %cst_67 = arith.constant 0.000000e+00 : f32
    %126 = vector.broadcast %cst_67 : f32 to vector<16x16xf32>
    %127 = arith.subf %126, %125 : vector<16x16xf32>
    %128 = math.exp %127 : vector<16x16xf32>
    %cst_68 = arith.constant 1.000000e+00 : f32
    %129 = vector.broadcast %cst_68 : f32 to vector<16x16xf32>
    %130 = arith.addf %129, %128 : vector<16x16xf32>
    %cst_69 = arith.constant 1.000000e+00 : f32
    %131 = vector.broadcast %cst_69 : f32 to vector<16x16xf32>
    %132 = arith.divf %131, %130 : vector<16x16xf32>
    %c5 = arith.constant 5 : index
    %c0_70 = arith.constant 0 : index
    %133 = memref.load %arg2[%c5, %c0_70] : memref<8x4xf32, #tpu.memory_space<smem>>
    %134 = vector.broadcast %133 : f32 to vector<16x16xf32>
    %135 = arith.mulf %134, %1 : vector<16x16xf32>
    %c5_71 = arith.constant 5 : index
    %c1_72 = arith.constant 1 : index
    %136 = memref.load %arg2[%c5_71, %c1_72] : memref<8x4xf32, #tpu.memory_space<smem>>
    %137 = vector.broadcast %136 : f32 to vector<16x16xf32>
    %138 = arith.mulf %137, %3 : vector<16x16xf32>
    %139 = arith.addf %135, %138 : vector<16x16xf32>
    %c5_73 = arith.constant 5 : index
    %c2_74 = arith.constant 2 : index
    %140 = memref.load %arg2[%c5_73, %c2_74] : memref<8x4xf32, #tpu.memory_space<smem>>
    %141 = vector.broadcast %140 : f32 to vector<16x16xf32>
    %142 = arith.mulf %141, %5 : vector<16x16xf32>
    %143 = arith.addf %139, %142 : vector<16x16xf32>
    %c5_75 = arith.constant 5 : index
    %c3_76 = arith.constant 3 : index
    %144 = memref.load %arg2[%c5_75, %c3_76] : memref<8x4xf32, #tpu.memory_space<smem>>
    %145 = vector.broadcast %144 : f32 to vector<16x16xf32>
    %146 = arith.mulf %145, %7 : vector<16x16xf32>
    %147 = arith.addf %143, %146 : vector<16x16xf32>
    %c5_77 = arith.constant 5 : index
    %148 = memref.load %arg3[%c5_77] : memref<8xf32, #tpu.memory_space<smem>>
    %149 = vector.broadcast %148 : f32 to vector<16x16xf32>
    %150 = arith.addf %147, %149 : vector<16x16xf32>
    %cst_78 = arith.constant 0.000000e+00 : f32
    %151 = vector.broadcast %cst_78 : f32 to vector<16x16xf32>
    %152 = arith.subf %151, %150 : vector<16x16xf32>
    %153 = math.exp %152 : vector<16x16xf32>
    %cst_79 = arith.constant 1.000000e+00 : f32
    %154 = vector.broadcast %cst_79 : f32 to vector<16x16xf32>
    %155 = arith.addf %154, %153 : vector<16x16xf32>
    %cst_80 = arith.constant 1.000000e+00 : f32
    %156 = vector.broadcast %cst_80 : f32 to vector<16x16xf32>
    %157 = arith.divf %156, %155 : vector<16x16xf32>
    %c6 = arith.constant 6 : index
    %c0_81 = arith.constant 0 : index
    %158 = memref.load %arg2[%c6, %c0_81] : memref<8x4xf32, #tpu.memory_space<smem>>
    %159 = vector.broadcast %158 : f32 to vector<16x16xf32>
    %160 = arith.mulf %159, %1 : vector<16x16xf32>
    %c6_82 = arith.constant 6 : index
    %c1_83 = arith.constant 1 : index
    %161 = memref.load %arg2[%c6_82, %c1_83] : memref<8x4xf32, #tpu.memory_space<smem>>
    %162 = vector.broadcast %161 : f32 to vector<16x16xf32>
    %163 = arith.mulf %162, %3 : vector<16x16xf32>
    %164 = arith.addf %160, %163 : vector<16x16xf32>
    %c6_84 = arith.constant 6 : index
    %c2_85 = arith.constant 2 : index
    %165 = memref.load %arg2[%c6_84, %c2_85] : memref<8x4xf32, #tpu.memory_space<smem>>
    %166 = vector.broadcast %165 : f32 to vector<16x16xf32>
    %167 = arith.mulf %166, %5 : vector<16x16xf32>
    %168 = arith.addf %164, %167 : vector<16x16xf32>
    %c6_86 = arith.constant 6 : index
    %c3_87 = arith.constant 3 : index
    %169 = memref.load %arg2[%c6_86, %c3_87] : memref<8x4xf32, #tpu.memory_space<smem>>
    %170 = vector.broadcast %169 : f32 to vector<16x16xf32>
    %171 = arith.mulf %170, %7 : vector<16x16xf32>
    %172 = arith.addf %168, %171 : vector<16x16xf32>
    %c6_88 = arith.constant 6 : index
    %173 = memref.load %arg3[%c6_88] : memref<8xf32, #tpu.memory_space<smem>>
    %174 = vector.broadcast %173 : f32 to vector<16x16xf32>
    %175 = arith.addf %172, %174 : vector<16x16xf32>
    %cst_89 = arith.constant 0.000000e+00 : f32
    %176 = vector.broadcast %cst_89 : f32 to vector<16x16xf32>
    %177 = arith.subf %176, %175 : vector<16x16xf32>
    %178 = math.exp %177 : vector<16x16xf32>
    %cst_90 = arith.constant 1.000000e+00 : f32
    %179 = vector.broadcast %cst_90 : f32 to vector<16x16xf32>
    %180 = arith.addf %179, %178 : vector<16x16xf32>
    %cst_91 = arith.constant 1.000000e+00 : f32
    %181 = vector.broadcast %cst_91 : f32 to vector<16x16xf32>
    %182 = arith.divf %181, %180 : vector<16x16xf32>
    %c7 = arith.constant 7 : index
    %c0_92 = arith.constant 0 : index
    %183 = memref.load %arg2[%c7, %c0_92] : memref<8x4xf32, #tpu.memory_space<smem>>
    %184 = vector.broadcast %183 : f32 to vector<16x16xf32>
    %185 = arith.mulf %184, %1 : vector<16x16xf32>
    %c7_93 = arith.constant 7 : index
    %c1_94 = arith.constant 1 : index
    %186 = memref.load %arg2[%c7_93, %c1_94] : memref<8x4xf32, #tpu.memory_space<smem>>
    %187 = vector.broadcast %186 : f32 to vector<16x16xf32>
    %188 = arith.mulf %187, %3 : vector<16x16xf32>
    %189 = arith.addf %185, %188 : vector<16x16xf32>
    %c7_95 = arith.constant 7 : index
    %c2_96 = arith.constant 2 : index
    %190 = memref.load %arg2[%c7_95, %c2_96] : memref<8x4xf32, #tpu.memory_space<smem>>
    %191 = vector.broadcast %190 : f32 to vector<16x16xf32>
    %192 = arith.mulf %191, %5 : vector<16x16xf32>
    %193 = arith.addf %189, %192 : vector<16x16xf32>
    %c7_97 = arith.constant 7 : index
    %c3_98 = arith.constant 3 : index
    %194 = memref.load %arg2[%c7_97, %c3_98] : memref<8x4xf32, #tpu.memory_space<smem>>
    %195 = vector.broadcast %194 : f32 to vector<16x16xf32>
    %196 = arith.mulf %195, %7 : vector<16x16xf32>
    %197 = arith.addf %193, %196 : vector<16x16xf32>
    %c7_99 = arith.constant 7 : index
    %198 = memref.load %arg3[%c7_99] : memref<8xf32, #tpu.memory_space<smem>>
    %199 = vector.broadcast %198 : f32 to vector<16x16xf32>
    %200 = arith.addf %197, %199 : vector<16x16xf32>
    %cst_100 = arith.constant 0.000000e+00 : f32
    %201 = vector.broadcast %cst_100 : f32 to vector<16x16xf32>
    %202 = arith.subf %201, %200 : vector<16x16xf32>
    %203 = math.exp %202 : vector<16x16xf32>
    %cst_101 = arith.constant 1.000000e+00 : f32
    %204 = vector.broadcast %cst_101 : f32 to vector<16x16xf32>
    %205 = arith.addf %204, %203 : vector<16x16xf32>
    %cst_102 = arith.constant 1.000000e+00 : f32
    %206 = vector.broadcast %cst_102 : f32 to vector<16x16xf32>
    %207 = arith.divf %206, %205 : vector<16x16xf32>
    %208 = tpu.transpose %32, [1, 0] : vector<16x16xf32> -> vector<16x16xf32>
    %cst_103 = arith.constant dense<0.000000e+00> : vector<16x16xf32>
    %209 = tpu.matmul %208, %132, %cst_103 {dimension_numbers = #tpu.dot_dimension_numbers<[1], [0], [0], [1], [0, 0, 1, 1], [], []>} : vector<16x16xf32>, vector<16x16xf32>, vector<16x16xf32> -> vector<16x16xf32>
    %cst_104 = arith.constant dense<0.000000e+00> : vector<16x16xf32>
    %210 = tpu.matmul %1, %209, %cst_104 {dimension_numbers = #tpu.dot_dimension_numbers<[1], [0], [0], [1], [0, 0, 1, 1], [], []>} : vector<16x16xf32>, vector<16x16xf32>, vector<16x16xf32> -> vector<16x16xf32>
    %211 = tpu.transpose %57, [1, 0] : vector<16x16xf32> -> vector<16x16xf32>
    %cst_105 = arith.constant dense<0.000000e+00> : vector<16x16xf32>
    %212 = tpu.matmul %211, %157, %cst_105 {dimension_numbers = #tpu.dot_dimension_numbers<[1], [0], [0], [1], [0, 0, 1, 1], [], []>} : vector<16x16xf32>, vector<16x16xf32>, vector<16x16xf32> -> vector<16x16xf32>
    %cst_106 = arith.constant dense<0.000000e+00> : vector<16x16xf32>
    %213 = tpu.matmul %3, %212, %cst_106 {dimension_numbers = #tpu.dot_dimension_numbers<[1], [0], [0], [1], [0, 0, 1, 1], [], []>} : vector<16x16xf32>, vector<16x16xf32>, vector<16x16xf32> -> vector<16x16xf32>
    %214 = tpu.transpose %82, [1, 0] : vector<16x16xf32> -> vector<16x16xf32>
    %cst_107 = arith.constant dense<0.000000e+00> : vector<16x16xf32>
    %215 = tpu.matmul %214, %182, %cst_107 {dimension_numbers = #tpu.dot_dimension_numbers<[1], [0], [0], [1], [0, 0, 1, 1], [], []>} : vector<16x16xf32>, vector<16x16xf32>, vector<16x16xf32> -> vector<16x16xf32>
    %cst_108 = arith.constant dense<0.000000e+00> : vector<16x16xf32>
    %216 = tpu.matmul %5, %215, %cst_108 {dimension_numbers = #tpu.dot_dimension_numbers<[1], [0], [0], [1], [0, 0, 1, 1], [], []>} : vector<16x16xf32>, vector<16x16xf32>, vector<16x16xf32> -> vector<16x16xf32>
    %217 = tpu.transpose %107, [1, 0] : vector<16x16xf32> -> vector<16x16xf32>
    %cst_109 = arith.constant dense<0.000000e+00> : vector<16x16xf32>
    %218 = tpu.matmul %217, %207, %cst_109 {dimension_numbers = #tpu.dot_dimension_numbers<[1], [0], [0], [1], [0, 0, 1, 1], [], []>} : vector<16x16xf32>, vector<16x16xf32>, vector<16x16xf32> -> vector<16x16xf32>
    %cst_110 = arith.constant dense<0.000000e+00> : vector<16x16xf32>
    %219 = tpu.matmul %7, %218, %cst_110 {dimension_numbers = #tpu.dot_dimension_numbers<[1], [0], [0], [1], [0, 0, 1, 1], [], []>} : vector<16x16xf32>, vector<16x16xf32>, vector<16x16xf32> -> vector<16x16xf32>
    %c0_111 = arith.constant 0 : index
    %c0_112 = arith.constant 0 : index
    %220 = memref.load %arg4[%c0_111, %c0_112] : memref<4x4xf32, #tpu.memory_space<smem>>
    %221 = vector.broadcast %220 : f32 to vector<16x16xf32>
    %222 = arith.mulf %221, %210 : vector<16x16xf32>
    %c0_113 = arith.constant 0 : index
    %c1_114 = arith.constant 1 : index
    %223 = memref.load %arg4[%c0_113, %c1_114] : memref<4x4xf32, #tpu.memory_space<smem>>
    %224 = vector.broadcast %223 : f32 to vector<16x16xf32>
    %225 = arith.mulf %224, %213 : vector<16x16xf32>
    %226 = arith.addf %222, %225 : vector<16x16xf32>
    %c0_115 = arith.constant 0 : index
    %c2_116 = arith.constant 2 : index
    %227 = memref.load %arg4[%c0_115, %c2_116] : memref<4x4xf32, #tpu.memory_space<smem>>
    %228 = vector.broadcast %227 : f32 to vector<16x16xf32>
    %229 = arith.mulf %228, %216 : vector<16x16xf32>
    %230 = arith.addf %226, %229 : vector<16x16xf32>
    %c0_117 = arith.constant 0 : index
    %c3_118 = arith.constant 3 : index
    %231 = memref.load %arg4[%c0_117, %c3_118] : memref<4x4xf32, #tpu.memory_space<smem>>
    %232 = vector.broadcast %231 : f32 to vector<16x16xf32>
    %233 = arith.mulf %232, %219 : vector<16x16xf32>
    %234 = arith.addf %230, %233 : vector<16x16xf32>
    %c0_119 = arith.constant 0 : index
    %235 = memref.load %arg5[%c0_119] : memref<4xf32, #tpu.memory_space<smem>>
    %236 = vector.broadcast %235 : f32 to vector<16x16xf32>
    %237 = arith.addf %234, %236 : vector<16x16xf32>
    %cst_120 = arith.constant 0.000000e+00 : f32
    %238 = vector.broadcast %cst_120 : f32 to vector<16x16xf32>
    %239 = arith.subf %238, %237 : vector<16x16xf32>
    %240 = math.exp %239 : vector<16x16xf32>
    %cst_121 = arith.constant 1.000000e+00 : f32
    %241 = vector.broadcast %cst_121 : f32 to vector<16x16xf32>
    %242 = arith.addf %241, %240 : vector<16x16xf32>
    %cst_122 = arith.constant 1.000000e+00 : f32
    %243 = vector.broadcast %cst_122 : f32 to vector<16x16xf32>
    %244 = arith.divf %243, %242 : vector<16x16xf32>
    %c0_123 = arith.constant 0 : index
    %c0_124 = arith.constant 0 : index
    %c0_125 = arith.constant 0 : index
    %c0_126 = arith.constant 0 : index
    %245 = vector.load %arg6[%c0_123, %c0_124, %c0_125, %c0_126] : memref<1x4x16x16xf32, #tpu.memory_space<vmem>>, vector<1x1x16x16xf32>
    %246 = vector.shape_cast %245 : vector<1x1x16x16xf32> to vector<16x16xf32>
    %247 = vector.shape_cast %244 : vector<16x16xf32> to vector<1x1x16x16xf32>
    tpu.vector_store %arg6[%c0_123, %c0_124, %c0_125, %c0_126], %247 {strides = array<i32>} : memref<1x4x16x16xf32, #tpu.memory_space<vmem>>, vector<1x1x16x16xf32>,
    %c1_127 = arith.constant 1 : index
    %c0_128 = arith.constant 0 : index
    %248 = memref.load %arg4[%c1_127, %c0_128] : memref<4x4xf32, #tpu.memory_space<smem>>
    %249 = vector.broadcast %248 : f32 to vector<16x16xf32>
    %250 = arith.mulf %249, %210 : vector<16x16xf32>
    %c1_129 = arith.constant 1 : index
    %c1_130 = arith.constant 1 : index
    %251 = memref.load %arg4[%c1_129, %c1_130] : memref<4x4xf32, #tpu.memory_space<smem>>
    %252 = vector.broadcast %251 : f32 to vector<16x16xf32>
    %253 = arith.mulf %252, %213 : vector<16x16xf32>
    %254 = arith.addf %250, %253 : vector<16x16xf32>
    %c1_131 = arith.constant 1 : index
    %c2_132 = arith.constant 2 : index
    %255 = memref.load %arg4[%c1_131, %c2_132] : memref<4x4xf32, #tpu.memory_space<smem>>
    %256 = vector.broadcast %255 : f32 to vector<16x16xf32>
    %257 = arith.mulf %256, %216 : vector<16x16xf32>
    %258 = arith.addf %254, %257 : vector<16x16xf32>
    %c1_133 = arith.constant 1 : index
    %c3_134 = arith.constant 3 : index
    %259 = memref.load %arg4[%c1_133, %c3_134] : memref<4x4xf32, #tpu.memory_space<smem>>
    %260 = vector.broadcast %259 : f32 to vector<16x16xf32>
    %261 = arith.mulf %260, %219 : vector<16x16xf32>
    %262 = arith.addf %258, %261 : vector<16x16xf32>
    %c1_135 = arith.constant 1 : index
    %263 = memref.load %arg5[%c1_135] : memref<4xf32, #tpu.memory_space<smem>>
    %264 = vector.broadcast %263 : f32 to vector<16x16xf32>
    %265 = arith.addf %262, %264 : vector<16x16xf32>
    %cst_136 = arith.constant 0.000000e+00 : f32
    %266 = vector.broadcast %cst_136 : f32 to vector<16x16xf32>
    %267 = arith.subf %266, %265 : vector<16x16xf32>
    %268 = math.exp %267 : vector<16x16xf32>
    %cst_137 = arith.constant 1.000000e+00 : f32
    %269 = vector.broadcast %cst_137 : f32 to vector<16x16xf32>
    %270 = arith.addf %269, %268 : vector<16x16xf32>
    %cst_138 = arith.constant 1.000000e+00 : f32
    %271 = vector.broadcast %cst_138 : f32 to vector<16x16xf32>
    %272 = arith.divf %271, %270 : vector<16x16xf32>
    %c0_139 = arith.constant 0 : index
    %c1_140 = arith.constant 1 : index
    %c0_141 = arith.constant 0 : index
    %c0_142 = arith.constant 0 : index
    %273 = vector.load %arg6[%c0_139, %c1_140, %c0_141, %c0_142] : memref<1x4x16x16xf32, #tpu.memory_space<vmem>>, vector<1x1x16x16xf32>
    %274 = vector.shape_cast %273 : vector<1x1x16x16xf32> to vector<16x16xf32>
    %275 = vector.shape_cast %272 : vector<16x16xf32> to vector<1x1x16x16xf32>
    tpu.vector_store %arg6[%c0_139, %c1_140, %c0_141, %c0_142], %275 {strides = array<i32>} : memref<1x4x16x16xf32, #tpu.memory_space<vmem>>, vector<1x1x16x16xf32>,
    %c2_143 = arith.constant 2 : index
    %c0_144 = arith.constant 0 : index
    %276 = memref.load %arg4[%c2_143, %c0_144] : memref<4x4xf32, #tpu.memory_space<smem>>
    %277 = vector.broadcast %276 : f32 to vector<16x16xf32>
    %278 = arith.mulf %277, %210 : vector<16x16xf32>
    %c2_145 = arith.constant 2 : index
    %c1_146 = arith.constant 1 : index
    %279 = memref.load %arg4[%c2_145, %c1_146] : memref<4x4xf32, #tpu.memory_space<smem>>
    %280 = vector.broadcast %279 : f32 to vector<16x16xf32>
    %281 = arith.mulf %280, %213 : vector<16x16xf32>
    %282 = arith.addf %278, %281 : vector<16x16xf32>
    %c2_147 = arith.constant 2 : index
    %c2_148 = arith.constant 2 : index
    %283 = memref.load %arg4[%c2_147, %c2_148] : memref<4x4xf32, #tpu.memory_space<smem>>
    %284 = vector.broadcast %283 : f32 to vector<16x16xf32>
    %285 = arith.mulf %284, %216 : vector<16x16xf32>
    %286 = arith.addf %282, %285 : vector<16x16xf32>
    %c2_149 = arith.constant 2 : index
    %c3_150 = arith.constant 3 : index
    %287 = memref.load %arg4[%c2_149, %c3_150] : memref<4x4xf32, #tpu.memory_space<smem>>
    %288 = vector.broadcast %287 : f32 to vector<16x16xf32>
    %289 = arith.mulf %288, %219 : vector<16x16xf32>
    %290 = arith.addf %286, %289 : vector<16x16xf32>
    %c2_151 = arith.constant 2 : index
    %291 = memref.load %arg5[%c2_151] : memref<4xf32, #tpu.memory_space<smem>>
    %292 = vector.broadcast %291 : f32 to vector<16x16xf32>
    %293 = arith.addf %290, %292 : vector<16x16xf32>
    %cst_152 = arith.constant 0.000000e+00 : f32
    %294 = vector.broadcast %cst_152 : f32 to vector<16x16xf32>
    %295 = arith.subf %294, %293 : vector<16x16xf32>
    %296 = math.exp %295 : vector<16x16xf32>
    %cst_153 = arith.constant 1.000000e+00 : f32
    %297 = vector.broadcast %cst_153 : f32 to vector<16x16xf32>
    %298 = arith.addf %297, %296 : vector<16x16xf32>
    %cst_154 = arith.constant 1.000000e+00 : f32
    %299 = vector.broadcast %cst_154 : f32 to vector<16x16xf32>
    %300 = arith.divf %299, %298 : vector<16x16xf32>
    %c0_155 = arith.constant 0 : index
    %c2_156 = arith.constant 2 : index
    %c0_157 = arith.constant 0 : index
    %c0_158 = arith.constant 0 : index
    %301 = vector.load %arg6[%c0_155, %c2_156, %c0_157, %c0_158] : memref<1x4x16x16xf32, #tpu.memory_space<vmem>>, vector<1x1x16x16xf32>
    %302 = vector.shape_cast %301 : vector<1x1x16x16xf32> to vector<16x16xf32>
    %303 = vector.shape_cast %300 : vector<16x16xf32> to vector<1x1x16x16xf32>
    tpu.vector_store %arg6[%c0_155, %c2_156, %c0_157, %c0_158], %303 {strides = array<i32>} : memref<1x4x16x16xf32, #tpu.memory_space<vmem>>, vector<1x1x16x16xf32>,
    %c3_159 = arith.constant 3 : index
    %c0_160 = arith.constant 0 : index
    %304 = memref.load %arg4[%c3_159, %c0_160] : memref<4x4xf32, #tpu.memory_space<smem>>
    %305 = vector.broadcast %304 : f32 to vector<16x16xf32>
    %306 = arith.mulf %305, %210 : vector<16x16xf32>
    %c3_161 = arith.constant 3 : index
    %c1_162 = arith.constant 1 : index
    %307 = memref.load %arg4[%c3_161, %c1_162] : memref<4x4xf32, #tpu.memory_space<smem>>
    %308 = vector.broadcast %307 : f32 to vector<16x16xf32>
    %309 = arith.mulf %308, %213 : vector<16x16xf32>
    %310 = arith.addf %306, %309 : vector<16x16xf32>
    %c3_163 = arith.constant 3 : index
    %c2_164 = arith.constant 2 : index
    %311 = memref.load %arg4[%c3_163, %c2_164] : memref<4x4xf32, #tpu.memory_space<smem>>
    %312 = vector.broadcast %311 : f32 to vector<16x16xf32>
    %313 = arith.mulf %312, %216 : vector<16x16xf32>
    %314 = arith.addf %310, %313 : vector<16x16xf32>
    %c3_165 = arith.constant 3 : index
    %c3_166 = arith.constant 3 : index
    %315 = memref.load %arg4[%c3_165, %c3_166] : memref<4x4xf32, #tpu.memory_space<smem>>
    %316 = vector.broadcast %315 : f32 to vector<16x16xf32>
    %317 = arith.mulf %316, %219 : vector<16x16xf32>
    %318 = arith.addf %314, %317 : vector<16x16xf32>
    %c3_167 = arith.constant 3 : index
    %319 = memref.load %arg5[%c3_167] : memref<4xf32, #tpu.memory_space<smem>>
    %320 = vector.broadcast %319 : f32 to vector<16x16xf32>
    %321 = arith.addf %318, %320 : vector<16x16xf32>
    %cst_168 = arith.constant 0.000000e+00 : f32
    %322 = vector.broadcast %cst_168 : f32 to vector<16x16xf32>
    %323 = arith.subf %322, %321 : vector<16x16xf32>
    %324 = math.exp %323 : vector<16x16xf32>
    %cst_169 = arith.constant 1.000000e+00 : f32
    %325 = vector.broadcast %cst_169 : f32 to vector<16x16xf32>
    %326 = arith.addf %325, %324 : vector<16x16xf32>
    %cst_170 = arith.constant 1.000000e+00 : f32
    %327 = vector.broadcast %cst_170 : f32 to vector<16x16xf32>
    %328 = arith.divf %327, %326 : vector<16x16xf32>
    %c0_171 = arith.constant 0 : index
    %c3_172 = arith.constant 3 : index
    %c0_173 = arith.constant 0 : index
    %c0_174 = arith.constant 0 : index
    %329 = vector.load %arg6[%c0_171, %c3_172, %c0_173, %c0_174] : memref<1x4x16x16xf32, #tpu.memory_space<vmem>>, vector<1x1x16x16xf32>
    %330 = vector.shape_cast %329 : vector<1x1x16x16xf32> to vector<16x16xf32>
    %331 = vector.shape_cast %328 : vector<16x16xf32> to vector<1x1x16x16xf32>
    tpu.vector_store %arg6[%c0_171, %c3_172, %c0_173, %c0_174], %331 {strides = array<i32>} : memref<1x4x16x16xf32, #tpu.memory_space<vmem>>, vector<1x1x16x16xf32>,
    return
  }
  func.func @transform_0(%arg0: i32) -> (i32, i32, i32, i32) {
    %c0_i32 = arith.constant 0 : i32
    %c0_i32_0 = arith.constant 0 : i32
    %c0_i32_1 = arith.constant 0 : i32
    %c0_i32_2 = arith.constant 0 : i32
    return %arg0, %c0_i32, %c0_i32_0, %c0_i32_1 : i32, i32, i32, i32
  }
  func.func @transform_1(%arg0: i32) -> (i32, i32) {
    %c0_i32 = arith.constant 0 : i32
    %c0_i32_0 = arith.constant 0 : i32
    %c0_i32_1 = arith.constant 0 : i32
    return %c0_i32, %c0_i32_0 : i32, i32
  }
  func.func @transform_2(%arg0: i32) -> i32 {
    %c0_i32 = arith.constant 0 : i32
    %c0_i32_0 = arith.constant 0 : i32
    return %c0_i32 : i32
  }
  func.func @transform_3(%arg0: i32) -> (i32, i32) {
    %c0_i32 = arith.constant 0 : i32
    %c0_i32_0 = arith.constant 0 : i32
    %c0_i32_1 = arith.constant 0 : i32
    return %c0_i32, %c0_i32_0 : i32, i32
  }
  func.func @transform_4(%arg0: i32) -> i32 {
    %c0_i32 = arith.constant 0 : i32
    %c0_i32_0 = arith.constant 0 : i32
    return %c0_i32 : i32
  }
  func.func @transform_5(%arg0: i32) -> (i32, i32, i32, i32) {
    %c0_i32 = arith.constant 0 : i32
    %c0_i32_0 = arith.constant 0 : i32
    %c0_i32_1 = arith.constant 0 : i32
    %c0_i32_2 = arith.constant 0 : i32
    return %arg0, %c0_i32, %c0_i32_0, %c0_i32_1 : i32, i32, i32, i32
  }
}

</mosaic_0001>

<llo_original>
// kernel: tpu_custom_call.1
$region0: #{tpu_custom_call.1}
  #allocation0 [shape = 'u32[]', space=smem, size = 0x4, offset = 0x4, fixed_abs, tag = 'smem constant byte address 0x4 - core index']
  #allocation1 [shape = 'u32[72,128]{1,0:T(1,128)}', space=vmem, size = 0x9000, scoped, tag = 'internal scratch']
  %s0 = inlined_call_operand.hbm [shape: f32[2,4,16,16], index: 0, kind: input, shape index: {}]
  %s1 = inlined_call_operand.vmem [shape: f32[8,4], index: 1, kind: input, shape index: {}]
  %s2 = inlined_call_operand.vmem [shape: f32[8], index: 2, kind: input, shape index: {}]
  %s3 = inlined_call_operand.vmem [shape: f32[4,4], index: 3, kind: input, shape index: {}]
  %s4 = inlined_call_operand.vmem [shape: f32[4], index: 4, kind: input, shape index: {}]
  %s5 = inlined_call_operand.hbm [shape: f32[2,4,16,16], index: 5, kind: output, shape index: {}]
  %s6 = sld [smem:[#allocation0]]
  $region73: #{tpu_custom_call.1} parent=0
    _
  %s8 = ssub.s32 1, %s6
  %s9 = scalar_select 0, %s8, %s6
  $region1: #{tpu_custom_call.1} parent=0
    #allocation2 [shape = 'u8[65536]{0}', space=vmem, size = 0x10000, scoped, tag = 'input window, operand 0']
    #allocation3 [shape = 's32[2]{0}', space=sflag, size = 0x8, scoped, tag = 'scoped memory for tpu_custom_call.1']
    #allocation4 [shape = 's32[2]{0}', space=sflag, size = 0x8, scoped, tag = 'scoped memory for tpu_custom_call.1']
    #allocation5 [shape = 's32[2]{0}', space=sflag, size = 0x8, scoped, tag = 'scoped memory for tpu_custom_call.1']
    #allocation6 [shape = 'u8[4096]{0}', space=smem, size = 0x1000, scoped, tag = 'input window, operand 1, single buffered']
    #allocation7 [shape = 'u8[512]{0}', space=smem, size = 0x200, scoped, tag = 'input window, operand 2, single buffered']
    #allocation8 [shape = 's32[1]{0}', space=sflag, size = 0x4, scoped, tag = 'scoped memory for tpu_custom_call.1']
    #allocation9 [shape = 'u8[2048]{0}', space=smem, size = 0x800, scoped, tag = 'input window, operand 3, single buffered']
    #allocation10 [shape = 'u8[512]{0}', space=smem, size = 0x200, scoped, tag = 'input window, operand 4, single buffered']
    #allocation11 [shape = 's32[1]{0}', space=sflag, size = 0x4, scoped, tag = 'scoped memory for tpu_custom_call.1']
    #allocation12 [shape = 'u8[65536]{0}', space=vmem, size = 0x10000, scoped, tag = 'output window, operand 0']
    %10 = vsyncpa [#allocation3], 0
    %s11 = scalar_lea.sflag [#allocation3], 1
    %12 = vsyncpa %s11, 0
    %13 = vsyncpa [#allocation5], 0
    %14 = vsyncpa [#allocation8], 0
    %15 = vsyncpa [#allocation11], 0
    %16 = vsyncpa [#allocation4], 0
    %s17 = scalar_lea.sflag [#allocation4], 1
    %18 = vsyncpa %s17, 0
    loop: start=0, step=1, limit=4
    $region2: #{tpu_custom_call.1} parent=1 // loop_pre_header
      _
    $region3: #{tpu_custom_call.1} parent=1 // loop_header
      %s20 = sphi 0, %s24
      %p21 = scmp.ge.s32.totalorder %s20, 4
      %s30 = sphi 0, %s32
      %s33 = sphi 0, %s30
      %s34 = sphi 0, %s33
      %s50 = sphi 0, %s34
      %s54 = sphi 0, %s54
      %s56 = sphi 0, %s54
      %s57 = sphi 0, %s56
      %s71 = sphi 0, %s57
      %s75 = sphi 0, %s75
      %s77 = sphi 0, %s75
      %s78 = sphi 0, %s77
      %s92 = sphi 0, %s78
      %s96 = sphi 0, %s96
      %s98 = sphi 0, %s96
      %s99 = sphi 0, %s98
      %s113 = sphi 0, %s99
      %s117 = sphi 0, %s117
      %s119 = sphi 0, %s117
      %s120 = sphi 0, %s119
      %s134 = sphi 0, %s120
      %s140 = sphi 0, %s142
      %s143 = sphi 0, %s140
      %s144 = sphi 0, %s143
      %s160 = sphi 0, %s144
    $region4: #{tpu_custom_call.1} parent=1 // loop_header_branch
      %23 = sbr.rel (%p21) target = $region8
    $region5: #{tpu_custom_call.1} parent=1 // loop_body
      %s25 = ssub.s32 %s20, 1
      %s26 = ssub.s32 %s20, 2
      %s27 = sadd.s32 %s20, 1
      %s28 = ssub.s32 %s20, %s27
      %p29 = scmp.eq.s32.totalorder %s28, 0
      %s31 = sadd.s32 %s30, 1
      %s32 = scalar_select %p29, %s30, %s31
      %p35 = pneg %p29
      %p36 = scmp.eq.s32.totalorder %s20, 1
      %p37 = por %p35, %p36
      %p38 = scmp.ne.s32.totalorder %s30, %s33
      %p39 = scmp.eq.s32.totalorder %s20, 0
      %p40 = por %p38, %p39
      %p41 = scmp.ne.s32.totalorder %s30, %s33
      %p42 = scmp.eq.s32.totalorder %s25, 1
      %p43 = por %p41, %p42
      %p44 = scmp.ne.s32.totalorder %s33, %s34
      %p45 = scmp.eq.s32.totalorder %s25, 0
      %p46 = por %p44, %p45
      %p47 = scmp.ne.s32.totalorder %s33, %s34
      %p48 = scmp.eq.s32.totalorder %s26, 1
      %p49 = por %p47, %p48
      %p51 = scmp.ne.s32.totalorder %s34, %s50
      %p52 = scmp.eq.s32.totalorder %s26, 0
      %p53 = por %p51, %p52
      %s55 = sadd.s32 %s54, 1
      %p58 = scmp.eq.s32.totalorder %s20, 1
      %p59 = scmp.ne.s32.totalorder %s54, %s56
      %p60 = scmp.eq.s32.totalorder %s20, 0
      %p61 = por %p59, %p60
      %p62 = scmp.ne.s32.totalorder %s54, %s56
      %p63 = scmp.eq.s32.totalorder %s25, 1
      %p64 = por %p62, %p63
      %p65 = scmp.ne.s32.totalorder %s56, %s57
      %p66 = scmp.eq.s32.totalorder %s25, 0
      %p67 = por %p65, %p66
      %p68 = scmp.ne.s32.totalorder %s56, %s57
      %p69 = scmp.eq.s32.totalorder %s26, 1
      %p70 = por %p68, %p69
      %p72 = scmp.ne.s32.totalorder %s57, %s71
      %p73 = scmp.eq.s32.totalorder %s26, 0
      %p74 = por %p72, %p73
      %s76 = sadd.s32 %s75, 1
      %p79 = scmp.eq.s32.totalorder %s20, 1
      %p80 = scmp.ne.s32.totalorder %s75, %s77
      %p81 = scmp.eq.s32.totalorder %s20, 0
      %p82 = por %p80, %p81
      %p83 = scmp.ne.s32.totalorder %s75, %s77
      %p84 = scmp.eq.s32.totalorder %s25, 1
      %p85 = por %p83, %p84
      %p86 = scmp.ne.s32.totalorder %s77, %s78
      %p87 = scmp.eq.s32.totalorder %s25, 0
      %p88 = por %p86, %p87
      %p89 = scmp.ne.s32.totalorder %s77, %s78
      %p90 = scmp.eq.s32.totalorder %s26, 1
      %p91 = por %p89, %p90
      %p93 = scmp.ne.s32.totalorder %s78, %s92
      %p94 = scmp.eq.s32.totalorder %s26, 0
      %p95 = por %p93, %p94
      %s97 = sadd.s32 %s96, 1
      %p100 = scmp.eq.s32.totalorder %s20, 1
      %p101 = scmp.ne.s32.totalorder %s96, %s98
      %p102 = scmp.eq.s32.totalorder %s20, 0
      %p103 = por %p101, %p102
      %p104 = scmp.ne.s32.totalorder %s96, %s98
      %p105 = scmp.eq.s32.totalorder %s25, 1
      %p106 = por %p104, %p105
      %p107 = scmp.ne.s32.totalorder %s98, %s99
      %p108 = scmp.eq.s32.totalorder %s25, 0
      %p109 = por %p107, %p108
      %p110 = scmp.ne.s32.totalorder %s98, %s99
      %p111 = scmp.eq.s32.totalorder %s26, 1
      %p112 = por %p110, %p111
      %p114 = scmp.ne.s32.totalorder %s99, %s113
      %p115 = scmp.eq.s32.totalorder %s26, 0
      %p116 = por %p114, %p115
      %s118 = sadd.s32 %s117, 1
      %p121 = scmp.eq.s32.totalorder %s20, 1
      %p122 = scmp.ne.s32.totalorder %s117, %s119
      %p123 = scmp.eq.s32.totalorder %s20, 0
      %p124 = por %p122, %p123
      %p125 = scmp.ne.s32.totalorder %s117, %s119
      %p126 = scmp.eq.s32.totalorder %s25, 1
      %p127 = por %p125, %p126
      %p128 = scmp.ne.s32.totalorder %s119, %s120
      %p129 = scmp.eq.s32.totalorder %s25, 0
      %p130 = por %p128, %p129
      %p131 = scmp.ne.s32.totalorder %s119, %s120
      %p132 = scmp.eq.s32.totalorder %s26, 1
      %p133 = por %p131, %p132
      %p135 = scmp.ne.s32.totalorder %s120, %s134
      %p136 = scmp.eq.s32.totalorder %s26, 0
      %p137 = por %p135, %p136
      %s138 = ssub.s32 %s20, %s27
      %p139 = scmp.eq.s32.totalorder %s138, 0
      %s141 = sadd.s32 %s140, 1
      %s142 = scalar_select %p139, %s140, %s141
      %p145 = pneg %p139
      %p146 = scmp.eq.s32.totalorder %s20, 1
      %p147 = por %p145, %p146
      %p148 = scmp.ne.s32.totalorder %s140, %s143
      %p149 = scmp.eq.s32.totalorder %s20, 0
      %p150 = por %p148, %p149
      %p151 = scmp.ne.s32.totalorder %s140, %s143
      %p152 = scmp.eq.s32.totalorder %s25, 1
      %p153 = por %p151, %p152
      %p154 = scmp.ne.s32.totalorder %s143, %s144
      %p155 = scmp.eq.s32.totalorder %s25, 0
      %p156 = por %p154, %p155
      %p157 = scmp.ne.s32.totalorder %s143, %s144
      %p158 = scmp.eq.s32.totalorder %s26, 1
      %p159 = por %p157, %p158
      %p161 = scmp.ne.s32.totalorder %s144, %s160
      %p162 = scmp.eq.s32.totalorder %s26, 0
      %p163 = por %p161, %p162
      %p164 = scmp.le.s32.totalorder 1, %s20
      %p165 = scmp.lt.s32.totalorder %s20, 3
      %p166 = pnand %p164, %p165
      %p167 = pneg %p166
      // Predicated region
      $region9: #{tpu_custom_call.1} parent=5 // pred_check
        _
      $region10: #{tpu_custom_call.1} parent=5 // pred_check_branch
        %169 = sbr.rel (%p166) target = $region12
      $region11: #{tpu_custom_call.1} parent=5 // pred_region
        %s170 = ssub.s32 %s20, 1
        // Predicated region
        $region13: #{tpu_custom_call.1} parent=11 // pred_check
          %p171 = pneg %p67
        $region14: #{tpu_custom_call.1} parent=11 // pred_check_branch
          %173 = sbr.rel (%p171) target = $region16
        $region15: #{tpu_custom_call.1} parent=11 // pred_region
          %175 = vsyncadd [#allocation5], 0
          %s177 = sshll.u32 %s1, 4
          %s178 = int_to_ptr.vmem [resolvable:$true] %s177
          %180 = dma.vmem_to_smem %s178, 128, [#allocation6], [#allocation5]
        $region16: #{tpu_custom_call.1} parent=11 // pred_fallthru
          _
        // Predicated region
        $region17: #{tpu_custom_call.1} parent=11 // pred_check
          %p181 = pneg %p88
        $region18: #{tpu_custom_call.1} parent=11 // pred_check_branch
          %183 = sbr.rel (%p181) target = $region20
        $region19: #{tpu_custom_call.1} parent=11 // pred_region
          %185 = vsyncadd [#allocation8], 0
          %s187 = sshll.u32 %s2, 4
          %s188 = int_to_ptr.vmem [resolvable:$true] %s187
          %190 = dma.vmem_to_smem %s188, 16, [#allocation7], [#allocation8]
        $region20: #{tpu_custom_call.1} parent=11 // pred_fallthru
          _
        // Predicated region
        $region21: #{tpu_custom_call.1} parent=11 // pred_check
          %p191 = pneg %p109
        $region22: #{tpu_custom_call.1} parent=11 // pred_check_branch
          %193 = sbr.rel (%p191) target = $region24
        $region23: #{tpu_custom_call.1} parent=11 // pred_region
          %195 = vsyncadd [#allocation8], 0
          %s197 = sshll.u32 %s3, 4
          %s198 = int_to_ptr.vmem [resolvable:$true] %s197
          %200 = dma.vmem_to_smem %s198, 64, [#allocation9], [#allocation8]
        $region24: #{tpu_custom_call.1} parent=11 // pred_fallthru
          _
        // Predicated region
        $region25: #{tpu_custom_call.1} parent=11 // pred_check
          %p201 = pneg %p130
        $region26: #{tpu_custom_call.1} parent=11 // pred_check_branch
          %203 = sbr.rel (%p201) target = $region28
        $region27: #{tpu_custom_call.1} parent=11 // pred_region
          %205 = vsyncadd [#allocation11], 0
          %s207 = sshll.u32 %s4, 4
          %s208 = int_to_ptr.vmem [resolvable:$true] %s207
          %210 = dma.vmem_to_smem %s208, 16, [#allocation10], [#allocation11]
        $region28: #{tpu_custom_call.1} parent=11 // pred_fallthru
          _
      $region12: #{tpu_custom_call.1} parent=5 // pred_fallthru
        _
      %p211 = scmp.lt.s32.totalorder %s20, 2
      // Predicated region
      $region29: #{tpu_custom_call.1} parent=5 // pred_check
        %p212 = pneg %p211
      $region30: #{tpu_custom_call.1} parent=5 // pred_check_branch
        %214 = sbr.rel (%p212) target = $region32
      $region31: #{tpu_custom_call.1} parent=5 // pred_region
        // Predicated region
        $region33: #{tpu_custom_call.1} parent=31 // pred_check
          %p215 = pneg %p40
        $region34: #{tpu_custom_call.1} parent=31 // pred_check_branch
          %217 = sbr.rel (%p215) target = $region36
        $region35: #{tpu_custom_call.1} parent=31 // pred_region
          %s218 = sand.u32 %s30, 1
          %s219 = scalar_lea.sflag [#allocation3], %s218
          %s220 = sand.u32 %s30, 1
          %s221 = smul.addr %s220, 64
          %s222 = scalar_lea.vmem [#allocation2], %s221
          %224 = vsyncadd %s219, 0
          %s225 = smul.addr %s20, 8
          %s226 = smul.addr %s225, 8
          %s227 = scalar_lea.hbm %s0, %s226
          %s228 = sshll.u32 %s227, 4
          %s229 = int_to_ptr.hbm [resolvable:$true] %s228
          %s230 = sshll.u32 %s222, 4
          %s231 = int_to_ptr.vmem [resolvable:$true] %s230
          %236 = dma.hbm_to_vmem [thread:$0]  %s229, 1024, %s231, %s219, 128, 128, 8
        $region36: #{tpu_custom_call.1} parent=31 // pred_fallthru
          _
      $region32: #{tpu_custom_call.1} parent=5 // pred_fallthru
        _
      %p237 = scmp.le.s32.totalorder 1, %s20
      %p238 = scmp.lt.s32.totalorder %s20, 3
      %p239 = pnand %p237, %p238
      %p240 = pneg %p239
      // Predicated region
      $region37: #{tpu_custom_call.1} parent=5 // pred_check
        _
      $region38: #{tpu_custom_call.1} parent=5 // pred_check_branch
        %242 = sbr.rel (%p239) target = $region40
      $region39: #{tpu_custom_call.1} parent=5 // pred_region
        %s243 = ssub.s32 %s20, 1
        %s244 = sand.u32 %s33, 1
        %s245 = scalar_lea.sflag [#allocation3], %s244
        %s246 = sand.u32 %s33, 1
        %s247 = smul.addr %s246, 64
        %s248 = scalar_lea.vmem [#allocation2], %s247
        // Predicated region
        $region41: #{tpu_custom_call.1} parent=39 // pred_check
          %p249 = pneg %p46
        $region42: #{tpu_custom_call.1} parent=39 // pred_check_branch
          %251 = sbr.rel (%p249) target = $region44
        $region43: #{tpu_custom_call.1} parent=39 // pred_region
          %253 = dma.done %s245, 1024
        $region44: #{tpu_custom_call.1} parent=39 // pred_fallthru
          _
        // Predicated region
        $region45: #{tpu_custom_call.1} parent=39 // pred_check
          %p254 = pneg %p67
        $region46: #{tpu_custom_call.1} parent=39 // pred_check_branch
          %256 = sbr.rel (%p254) target = $region48
        $region47: #{tpu_custom_call.1} parent=39 // pred_region
          %258 = dma.done [#allocation5], 128
        $region48: #{tpu_custom_call.1} parent=39 // pred_fallthru
          _
        // Predicated region
        $region49: #{tpu_custom_call.1} parent=39 // pred_check
          %p259 = pneg %p88
        $region50: #{tpu_custom_call.1} parent=39 // pred_check_branch
          %261 = sbr.rel (%p259) target = $region52
        $region51: #{tpu_custom_call.1} parent=39 // pred_region
          %263 = dma.done [#allocation8], 16
        $region52: #{tpu_custom_call.1} parent=39 // pred_fallthru
          _
        // Predicated region
        $region53: #{tpu_custom_call.1} parent=39 // pred_check
          %p264 = pneg %p109
        $region54: #{tpu_custom_call.1} parent=39 // pred_check_branch
          %266 = sbr.rel (%p264) target = $region56
        $region55: #{tpu_custom_call.1} parent=39 // pred_region
          %268 = dma.done [#allocation8], 64
        $region56: #{tpu_custom_call.1} parent=39 // pred_fallthru
          _
        // Predicated region
        $region57: #{tpu_custom_call.1} parent=39 // pred_check
          %p269 = pneg %p130
        $region58: #{tpu_custom_call.1} parent=39 // pred_check_branch
          %271 = sbr.rel (%p269) target = $region60
        $region59: #{tpu_custom_call.1} parent=39 // pred_region
          %273 = dma.done [#allocation11], 16
        $region60: #{tpu_custom_call.1} parent=39 // pred_fallthru
          _
        %274 = sfence
        %s275 = sand.u32 %s33, 1
        %s276 = scalar_lea.sflag [#allocation3], %s275
        %s277 = sand.u32 %s33, 1
        %s278 = smul.addr %s277, 64
        %s279 = scalar_lea.vmem [#allocation2], %s278
        %p280 = pneg %p46
        %p281 = pneg %p43
        %p282 = pneg %p67
        %p283 = pneg %p64
        %p284 = pneg %p88
        %p285 = pneg %p85
        %p286 = pneg %p109
        %p287 = pneg %p106
        %p288 = pneg %p130
        %p289 = pneg %p127
        %p290 = pneg %p156
        %p291 = pneg %p153
        %s292 = sand.u32 %s143, 1
        %s293 = scalar_lea.sflag [#allocation4], %s292
        %s294 = sand.u32 %s143, 1
        %s295 = smul.addr %s294, 64
        %s296 = scalar_lea.vmem [#allocation12], %s295
        %v297 = vld [vmem:[%s248] sm:$0xff]
        %v298 = vld [vmem:[%s248 + $0x8] sm:$0xff]
        %s299 = scalar_lea.vmem %s248, 16 [#allocation2]
        %v300 = vld [vmem:[%s299] sm:$0xff]
        %v301 = vld [vmem:[%s299 + $0x8] sm:$0xff]
        %s302 = scalar_lea.vmem %s248, 32 [#allocation2]
        %v303 = vld [vmem:[%s302] sm:$0xff]
        %v304 = vld [vmem:[%s302 + $0x8] sm:$0xff]
        %s305 = scalar_lea.vmem %s248, 48 [#allocation2]
        %v306 = vld [vmem:[%s305] sm:$0xff]
        %v307 = vld [vmem:[%s305 + $0x8] sm:$0xff]
        %s308 = sld [smem:[#allocation6]]
        %v309 = vstv %s308
        %v310 = vmul.f32 %v309, %v297
        %v311 = vmul.f32 %v309, %v298
        %s312 = sld [smem:[#allocation6 + $0x1]]
        %v313 = vstv %s312
        %v314 = vmul.f32 %v313, %v300
        %v315 = vmul.f32 %v313, %v301
        %v316 = vadd.f32 %v310, %v314
        %v317 = vadd.f32 %v311, %v315
        %s318 = sld [smem:[#allocation6 + $0x2]]
        %v319 = vstv %s318
        %v320 = vmul.f32 %v319, %v303
        %v321 = vmul.f32 %v319, %v304
        %v322 = vadd.f32 %v316, %v320
        %v323 = vadd.f32 %v317, %v321
        %s324 = sld [smem:[#allocation6 + $0x3]]
        %v325 = vstv %s324
        %v326 = vmul.f32 %v325, %v306
        %v327 = vmul.f32 %v325, %v307
        %v328 = vadd.f32 %v322, %v326
        %v329 = vadd.f32 %v323, %v327
        %s330 = sld [smem:[#allocation7]]
        %v331 = vstv %s330
        %v332 = vadd.f32 %v328, %v331
        %v333 = vadd.f32 %v329, %v331
        %v334 = vsub.f32 0.0, %v332
        %v335 = vsub.f32 0.0, %v333
        %v336 = vmul.f32 %v334, 1.442695
        %v337 = vpow.pop %v336
        %v338 = vmul.f32 %v335, 1.442695
        %v339 = vpow.pop %v338
        %v340 = vadd.f32 %v337, 1.0
        %v341 = vadd.f32 %v339, 1.0
        %v342 = vrcp.pop %v340
        %v343 = vmul.f32 %v340, %v342
        %v344 = vsub.f32 1.0, %v343
        %v345 = vmul.f32 %v342, %v344
        %v346 = vadd.f32 %v342, %v345
        %vm347 = vweird.f32 %v340
        %vm348 = vweird.f32 %v342
        %vm349 = vmor %vm347, %vm348
        %v350 = vsel %vm349, %v342, %v346
        %v351 = vand.u32 2147483647, %v340
        %vm352 = vcmp.eq.f32.partialorder %v351, 8.507059e+37
        %v353 = vand.u32 %v340, 2147483648
        %v354 = vor.u32 1.1754944e-38, %v353
        %v355 = vsel %vm352, %v354, %v350
        %v356 = vmul.f32 1.0, %v355
        %v357 = vrcp.pop %v341
        %v358 = vmul.f32 %v341, %v357
        %v359 = vsub.f32 1.0, %v358
        %v360 = vmul.f32 %v357, %v359
        %v361 = vadd.f32 %v357, %v360
        %vm362 = vweird.f32 %v341
        %vm363 = vweird.f32 %v357
        %vm364 = vmor %vm362, %vm363
        %v365 = vsel %vm364, %v357, %v361
        %v366 = vand.u32 2147483647, %v341
        %vm367 = vcmp.eq.f32.partialorder %v366, 8.507059e+37
        %v368 = vand.u32 %v341, 2147483648
        %v369 = vor.u32 1.1754944e-38, %v368
        %v370 = vsel %vm367, %v369, %v365
        %v371 = vmul.f32 1.0, %v370
        %s372 = sld [smem:[#allocation6 + $0x80]]
        %v373 = vstv %s372
        %v374 = vmul.f32 %v373, %v297
        %v375 = vmul.f32 %v373, %v298
        %s376 = sld [smem:[#allocation6 + $0x81]]
        %v377 = vstv %s376
        %v378 = vmul.f32 %v377, %v300
        %v379 = vmul.f32 %v377, %v301
        %v380 = vadd.f32 %v374, %v378
        %v381 = vadd.f32 %v375, %v379
        %s382 = sld [smem:[#allocation6 + $0x82]]
        %v383 = vstv %s382
        %v384 = vmul.f32 %v383, %v303
        %v385 = vmul.f32 %v383, %v304
        %v386 = vadd.f32 %v380, %v384
        %v387 = vadd.f32 %v381, %v385
        %s388 = sld [smem:[#allocation6 + $0x83]]
        %v389 = vstv %s388
        %v390 = vmul.f32 %v389, %v306
        %v391 = vmul.f32 %v389, %v307
        %v392 = vadd.f32 %v386, %v390
        %v393 = vadd.f32 %v387, %v391
        %s394 = sld [smem:[#allocation7 + $0x1]]
        %v395 = vstv %s394
        %v396 = vadd.f32 %v392, %v395
        %v397 = vadd.f32 %v393, %v395
        %v398 = vsub.f32 0.0, %v396
        %v399 = vsub.f32 0.0, %v397
        %v400 = vmul.f32 %v398, 1.442695
        %v401 = vpow.pop %v400
        %v402 = vmul.f32 %v399, 1.442695
        %v403 = vpow.pop %v402
        %v404 = vadd.f32 %v401, 1.0
        %v405 = vadd.f32 %v403, 1.0
        %v406 = vrcp.pop %v404
        %v407 = vmul.f32 %v404, %v406
        %v408 = vsub.f32 1.0, %v407
        %v409 = vmul.f32 %v406, %v408
        %v410 = vadd.f32 %v406, %v409
        %vm411 = vweird.f32 %v404
        %vm412 = vweird.f32 %v406
        %vm413 = vmor %vm411, %vm412
        %v414 = vsel %vm413, %v406, %v410
        %v415 = vand.u32 2147483647, %v404
        %vm416 = vcmp.eq.f32.partialorder %v415, 8.507059e+37
        %v417 = vand.u32 %v404, 2147483648
        %v418 = vor.u32 1.1754944e-38, %v417
        %v419 = vsel %vm416, %v418, %v414
        %v420 = vmul.f32 1.0, %v419
        %v421 = vrcp.pop %v405
        %v422 = vmul.f32 %v405, %v421
        %v423 = vsub.f32 1.0, %v422
        %v424 = vmul.f32 %v421, %v423
        %v425 = vadd.f32 %v421, %v424
        %vm426 = vweird.f32 %v405
        %vm427 = vweird.f32 %v421
        %vm428 = vmor %vm426, %vm427
        %v429 = vsel %vm428, %v421, %v425
        %v430 = vand.u32 2147483647, %v405
        %vm431 = vcmp.eq.f32.partialorder %v430, 8.507059e+37
        %v432 = vand.u32 %v405, 2147483648
        %v433 = vor.u32 1.1754944e-38, %v432
        %v434 = vsel %vm431, %v433, %v429
        %v435 = vmul.f32 1.0, %v434
        %s436 = sld [smem:[#allocation6 + $0x100]]
        %v437 = vstv %s436
        %v438 = vmul.f32 %v437, %v297
        %v439 = vmul.f32 %v437, %v298
        %s440 = sld [smem:[#allocation6 + $0x101]]
        %v441 = vstv %s440
        %v442 = vmul.f32 %v441, %v300
        %v443 = vmul.f32 %v441, %v301
        %v444 = vadd.f32 %v438, %v442
        %v445 = vadd.f32 %v439, %v443
        %s446 = sld [smem:[#allocation6 + $0x102]]
        %v447 = vstv %s446
        %v448 = vmul.f32 %v447, %v303
        %v449 = vmul.f32 %v447, %v304
        %v450 = vadd.f32 %v444, %v448
        %v451 = vadd.f32 %v445, %v449
        %s452 = sld [smem:[#allocation6 + $0x103]]
        %v453 = vstv %s452
        %v454 = vmul.f32 %v453, %v306
        %v455 = vmul.f32 %v453, %v307
        %v456 = vadd.f32 %v450, %v454
        %v457 = vadd.f32 %v451, %v455
        %s458 = sld [smem:[#allocation7 + $0x2]]
        %v459 = vstv %s458
        %v460 = vadd.f32 %v456, %v459
        %v461 = vadd.f32 %v457, %v459
        %v462 = vsub.f32 0.0, %v460
        %v463 = vsub.f32 0.0, %v461
        %v464 = vmul.f32 %v462, 1.442695
        %v465 = vpow.pop %v464
        %v466 = vmul.f32 %v463, 1.442695
        %v467 = vpow.pop %v466
        %v468 = vadd.f32 %v465, 1.0
        %v469 = vadd.f32 %v467, 1.0
        %v470 = vrcp.pop %v468
        %v471 = vmul.f32 %v468, %v470
        %v472 = vsub.f32 1.0, %v471
        %v473 = vmul.f32 %v470, %v472
        %v474 = vadd.f32 %v470, %v473
        %vm475 = vweird.f32 %v468
        %vm476 = vweird.f32 %v470
        %vm477 = vmor %vm475, %vm476
        %v478 = vsel %vm477, %v470, %v474
        %v479 = vand.u32 2147483647, %v468
        %vm480 = vcmp.eq.f32.partialorder %v479, 8.507059e+37
        %v481 = vand.u32 %v468, 2147483648
        %v482 = vor.u32 1.1754944e-38, %v481
        %v483 = vsel %vm480, %v482, %v478
        %v484 = vmul.f32 1.0, %v483
        %v485 = vrcp.pop %v469
        %v486 = vmul.f32 %v469, %v485
        %v487 = vsub.f32 1.0, %v486
        %v488 = vmul.f32 %v485, %v487
        %v489 = vadd.f32 %v485, %v488
        %vm490 = vweird.f32 %v469
        %vm491 = vweird.f32 %v485
        %vm492 = vmor %vm490, %vm491
        %v493 = vsel %vm492, %v485, %v489
        %v494 = vand.u32 2147483647, %v469
        %vm495 = vcmp.eq.f32.partialorder %v494, 8.507059e+37
        %v496 = vand.u32 %v469, 2147483648
        %v497 = vor.u32 1.1754944e-38, %v496
        %v498 = vsel %vm495, %v497, %v493
        %v499 = vmul.f32 1.0, %v498
        %s500 = sld [smem:[#allocation6 + $0x180]]
        %v501 = vstv %s500
        %v502 = vmul.f32 %v501, %v297
        %v503 = vmul.f32 %v501, %v298
        %s504 = sld [smem:[#allocation6 + $0x181]]
        %v505 = vstv %s504
        %v506 = vmul.f32 %v505, %v300
        %v507 = vmul.f32 %v505, %v301
        %v508 = vadd.f32 %v502, %v506
        %v509 = vadd.f32 %v503, %v507
        %s510 = sld [smem:[#allocation6 + $0x182]]
        %v511 = vstv %s510
        %v512 = vmul.f32 %v511, %v303
        %v513 = vmul.f32 %v511, %v304
        %v514 = vadd.f32 %v508, %v512
        %v515 = vadd.f32 %v509, %v513
        %s516 = sld [smem:[#allocation6 + $0x183]]
        %v517 = vstv %s516
        %v518 = vmul.f32 %v517, %v306
        %v519 = vmul.f32 %v517, %v307
        %v520 = vadd.f32 %v514, %v518
        %v521 = vadd.f32 %v515, %v519
        %s522 = sld [smem:[#allocation7 + $0x3]]
        %v523 = vstv %s522
        %v524 = vadd.f32 %v520, %v523
        %v525 = vadd.f32 %v521, %v523
        %v526 = vsub.f32 0.0, %v524
        %v527 = vsub.f32 0.0, %v525
        %v528 = vmul.f32 %v526, 1.442695
        %v529 = vpow.pop %v528
        %v530 = vmul.f32 %v527, 1.442695
        %v531 = vpow.pop %v530
        %v532 = vadd.f32 %v529, 1.0
        %v533 = vadd.f32 %v531, 1.0
        %v534 = vrcp.pop %v532
        %v535 = vmul.f32 %v532, %v534
        %v536 = vsub.f32 1.0, %v535
        %v537 = vmul.f32 %v534, %v536
        %v538 = vadd.f32 %v534, %v537
        %vm539 = vweird.f32 %v532
        %vm540 = vweird.f32 %v534
        %vm541 = vmor %vm539, %vm540
        %v542 = vsel %vm541, %v534, %v538
        %v543 = vand.u32 2147483647, %v532
        %vm544 = vcmp.eq.f32.partialorder %v543, 8.507059e+37
        %v545 = vand.u32 %v532, 2147483648
        %v546 = vor.u32 1.1754944e-38, %v545
        %v547 = vsel %vm544, %v546, %v542
        %v548 = vmul.f32 1.0, %v547
        %v549 = vrcp.pop %v533
        %v550 = vmul.f32 %v533, %v549
        %v551 = vsub.f32 1.0, %v550
        %v552 = vmul.f32 %v549, %v551
        %v553 = vadd.f32 %v549, %v552
        %vm554 = vweird.f32 %v533
        %vm555 = vweird.f32 %v549
        %vm556 = vmor %vm554, %vm555
        %v557 = vsel %vm556, %v549, %v553
        %v558 = vand.u32 2147483647, %v533
        %vm559 = vcmp.eq.f32.partialorder %v558, 8.507059e+37
        %v560 = vand.u32 %v533, 2147483648
        %v561 = vor.u32 1.1754944e-38, %v560
        %v562 = vsel %vm559, %v561, %v557
        %v563 = vmul.f32 1.0, %v562
        %s564 = sld [smem:[#allocation6 + $0x200]]
        %v565 = vstv %s564
        %v566 = vmul.f32 %v565, %v297
        %v567 = vmul.f32 %v565, %v298
        %s568 = sld [smem:[#allocation6 + $0x201]]
        %v569 = vstv %s568
        %v570 = vmul.f32 %v569, %v300
        %v571 = vmul.f32 %v569, %v301
        %v572 = vadd.f32 %v566, %v570
        %v573 = vadd.f32 %v567, %v571
        %s574 = sld [smem:[#allocation6 + $0x202]]
        %v575 = vstv %s574
        %v576 = vmul.f32 %v575, %v303
        %v577 = vmul.f32 %v575, %v304
        %v578 = vadd.f32 %v572, %v576
        %v579 = vadd.f32 %v573, %v577
        %s580 = sld [smem:[#allocation6 + $0x203]]
        %v581 = vstv %s580
        %v582 = vmul.f32 %v581, %v306
        %v583 = vmul.f32 %v581, %v307
        %v584 = vadd.f32 %v578, %v582
        %v585 = vadd.f32 %v579, %v583
        %s586 = sld [smem:[#allocation7 + $0x4]]
        %v587 = vstv %s586
        %v588 = vadd.f32 %v584, %v587
        %v589 = vadd.f32 %v585, %v587
        %v590 = vsub.f32 0.0, %v588
        %v591 = vsub.f32 0.0, %v589
        %v592 = vmul.f32 %v590, 1.442695
        %v593 = vpow.pop %v592
        %v594 = vmul.f32 %v591, 1.442695
        %v595 = vpow.pop %v594
        %v596 = vadd.f32 %v593, 1.0
        %v597 = vadd.f32 %v595, 1.0
        %v598 = vrcp.pop %v596
        %v599 = vmul.f32 %v596, %v598
        %v600 = vsub.f32 1.0, %v599
        %v601 = vmul.f32 %v598, %v600
        %v602 = vadd.f32 %v598, %v601
        %vm603 = vweird.f32 %v596
        %vm604 = vweird.f32 %v598
        %vm605 = vmor %vm603, %vm604
        %v606 = vsel %vm605, %v598, %v602
        %v607 = vand.u32 2147483647, %v596
        %vm608 = vcmp.eq.f32.partialorder %v607, 8.507059e+37
        %v609 = vand.u32 %v596, 2147483648
        %v610 = vor.u32 1.1754944e-38, %v609
        %v611 = vsel %vm608, %v610, %v606
        %v612 = vmul.f32 1.0, %v611
        %v613 = vrcp.pop %v597
        %v614 = vmul.f32 %v597, %v613
        %v615 = vsub.f32 1.0, %v614
        %v616 = vmul.f32 %v613, %v615
        %v617 = vadd.f32 %v613, %v616
        %vm618 = vweird.f32 %v597
        %vm619 = vweird.f32 %v613
        %vm620 = vmor %vm618, %vm619
        %v621 = vsel %vm620, %v613, %v617
        %v622 = vand.u32 2147483647, %v597
        %vm623 = vcmp.eq.f32.partialorder %v622, 8.507059e+37
        %v624 = vand.u32 %v597, 2147483648
        %v625 = vor.u32 1.1754944e-38, %v624
        %v626 = vsel %vm623, %v625, %v621
        %v627 = vmul.f32 1.0, %v626
        %s628 = sld [smem:[#allocation6 + $0x280]]
        %v629 = vstv %s628
        %v630 = vmul.f32 %v629, %v297
        %v631 = vmul.f32 %v629, %v298
        %s632 = sld [smem:[#allocation6 + $0x281]]
        %v633 = vstv %s632
        %v634 = vmul.f32 %v633, %v300
        %v635 = vmul.f32 %v633, %v301
        %v636 = vadd.f32 %v630, %v634
        %v637 = vadd.f32 %v631, %v635
        %s638 = sld [smem:[#allocation6 + $0x282]]
        %v639 = vstv %s638
        %v640 = vmul.f32 %v639, %v303
        %v641 = vmul.f32 %v639, %v304
        %v642 = vadd.f32 %v636, %v640
        %v643 = vadd.f32 %v637, %v641
        %s644 = sld [smem:[#allocation6 + $0x283]]
        %v645 = vstv %s644
        %v646 = vmul.f32 %v645, %v306
        %v647 = vmul.f32 %v645, %v307
        %v648 = vadd.f32 %v642, %v646
        %v649 = vadd.f32 %v643, %v647
        %s650 = sld [smem:[#allocation7 + $0x5]]
        %v651 = vstv %s650
        %v652 = vadd.f32 %v648, %v651
        %v653 = vadd.f32 %v649, %v651
        %v654 = vsub.f32 0.0, %v652
        %v655 = vsub.f32 0.0, %v653
        %v656 = vmul.f32 %v654, 1.442695
        %v657 = vpow.pop %v656
        %v658 = vmul.f32 %v655, 1.442695
        %v659 = vpow.pop %v658
        %v660 = vadd.f32 %v657, 1.0
        %v661 = vadd.f32 %v659, 1.0
        %v662 = vrcp.pop %v660
        %v663 = vmul.f32 %v660, %v662
        %v664 = vsub.f32 1.0, %v663
        %v665 = vmul.f32 %v662, %v664
        %v666 = vadd.f32 %v662, %v665
        %vm667 = vweird.f32 %v660
        %vm668 = vweird.f32 %v662
        %vm669 = vmor %vm667, %vm668
        %v670 = vsel %vm669, %v662, %v666
        %v671 = vand.u32 2147483647, %v660
        %vm672 = vcmp.eq.f32.partialorder %v671, 8.507059e+37
        %v673 = vand.u32 %v660, 2147483648
        %v674 = vor.u32 1.1754944e-38, %v673
        %v675 = vsel %vm672, %v674, %v670
        %v676 = vmul.f32 1.0, %v675
        %v677 = vrcp.pop %v661
        %v678 = vmul.f32 %v661, %v677
        %v679 = vsub.f32 1.0, %v678
        %v680 = vmul.f32 %v677, %v679
        %v681 = vadd.f32 %v677, %v680
        %vm682 = vweird.f32 %v661
        %vm683 = vweird.f32 %v677
        %vm684 = vmor %vm682, %vm683
        %v685 = vsel %vm684, %v677, %v681
        %v686 = vand.u32 2147483647, %v661
        %vm687 = vcmp.eq.f32.partialorder %v686, 8.507059e+37
        %v688 = vand.u32 %v661, 2147483648
        %v689 = vor.u32 1.1754944e-38, %v688
        %v690 = vsel %vm687, %v689, %v685
        %v691 = vmul.f32 1.0, %v690
        %s692 = sld [smem:[#allocation6 + $0x300]]
        %v693 = vstv %s692
        %v694 = vmul.f32 %v693, %v297
        %v695 = vmul.f32 %v693, %v298
        %s696 = sld [smem:[#allocation6 + $0x301]]
        %v697 = vstv %s696
        %v698 = vmul.f32 %v697, %v300
        %v699 = vmul.f32 %v697, %v301
        %v700 = vadd.f32 %v694, %v698
        %v701 = vadd.f32 %v695, %v699
        %s702 = sld [smem:[#allocation6 + $0x302]]
        %v703 = vstv %s702
        %v704 = vmul.f32 %v703, %v303
        %v705 = vmul.f32 %v703, %v304
        %v706 = vadd.f32 %v700, %v704
        %v707 = vadd.f32 %v701, %v705
        %s708 = sld [smem:[#allocation6 + $0x303]]
        %v709 = vstv %s708
        %v710 = vmul.f32 %v709, %v306
        %v711 = vmul.f32 %v709, %v307
        %v712 = vadd.f32 %v706, %v710
        %v713 = vadd.f32 %v707, %v711
        %s714 = sld [smem:[#allocation7 + $0x6]]
        %v715 = vstv %s714
        %v716 = vadd.f32 %v712, %v715
        %v717 = vadd.f32 %v713, %v715
        %v718 = vsub.f32 0.0, %v716
        %v719 = vsub.f32 0.0, %v717
        %v720 = vmul.f32 %v718, 1.442695
        %v721 = vpow.pop %v720
        %v722 = vmul.f32 %v719, 1.442695
        %v723 = vpow.pop %v722
        %v724 = vadd.f32 %v721, 1.0
        %v725 = vadd.f32 %v723, 1.0
        %v726 = vrcp.pop %v724
        %v727 = vmul.f32 %v724, %v726
        %v728 = vsub.f32 1.0, %v727
        %v729 = vmul.f32 %v726, %v728
        %v730 = vadd.f32 %v726, %v729
        %vm731 = vweird.f32 %v724
        %vm732 = vweird.f32 %v726
        %vm733 = vmor %vm731, %vm732
        %v734 = vsel %vm733, %v726, %v730
        %v735 = vand.u32 2147483647, %v724
        %vm736 = vcmp.eq.f32.partialorder %v735, 8.507059e+37
        %v737 = vand.u32 %v724, 2147483648
        %v738 = vor.u32 1.1754944e-38, %v737
        %v739 = vsel %vm736, %v738, %v734
        %v740 = vmul.f32 1.0, %v739
        %v741 = vrcp.pop %v725
        %v742 = vmul.f32 %v725, %v741
        %v743 = vsub.f32 1.0, %v742
        %v744 = vmul.f32 %v741, %v743
        %v745 = vadd.f32 %v741, %v744
        %vm746 = vweird.f32 %v725
        %vm747 = vweird.f32 %v741
        %vm748 = vmor %vm746, %vm747
        %v749 = vsel %vm748, %v741, %v745
        %v750 = vand.u32 2147483647, %v725
        %vm751 = vcmp.eq.f32.partialorder %v750, 8.507059e+37
        %v752 = vand.u32 %v725, 2147483648
        %v753 = vor.u32 1.1754944e-38, %v752
        %v754 = vsel %vm751, %v753, %v749
        %v755 = vmul.f32 1.0, %v754
        %s756 = sld [smem:[#allocation6 + $0x380]]
        %v757 = vstv %s756
        %v758 = vmul.f32 %v757, %v297
        %v759 = vmul.f32 %v757, %v298
        %s760 = sld [smem:[#allocation6 + $0x381]]
        %v761 = vstv %s760
        %v762 = vmul.f32 %v761, %v300
        %v763 = vmul.f32 %v761, %v301
        %v764 = vadd.f32 %v758, %v762
        %v765 = vadd.f32 %v759, %v763
        %s766 = sld [smem:[#allocation6 + $0x382]]
        %v767 = vstv %s766
        %v768 = vmul.f32 %v767, %v303
        %v769 = vmul.f32 %v767, %v304
        %v770 = vadd.f32 %v764, %v768
        %v771 = vadd.f32 %v765, %v769
        %s772 = sld [smem:[#allocation6 + $0x383]]
        %v773 = vstv %s772
        %v774 = vmul.f32 %v773, %v306
        %v775 = vmul.f32 %v773, %v307
        %v776 = vadd.f32 %v770, %v774
        %v777 = vadd.f32 %v771, %v775
        %s778 = sld [smem:[#allocation7 + $0x7]]
        %v779 = vstv %s778
        %v780 = vadd.f32 %v776, %v779
        %v781 = vadd.f32 %v777, %v779
        %v782 = vsub.f32 0.0, %v780
        %v783 = vsub.f32 0.0, %v781
        %v784 = vmul.f32 %v782, 1.442695
        %v785 = vpow.pop %v784
        %v786 = vmul.f32 %v783, 1.442695
        %v787 = vpow.pop %v786
        %v788 = vadd.f32 %v785, 1.0
        %v789 = vadd.f32 %v787, 1.0
        %v790 = vrcp.pop %v788
        %v791 = vmul.f32 %v788, %v790
        %v792 = vsub.f32 1.0, %v791
        %v793 = vmul.f32 %v790, %v792
        %v794 = vadd.f32 %v790, %v793
        %vm795 = vweird.f32 %v788
        %vm796 = vweird.f32 %v790
        %vm797 = vmor %vm795, %vm796
        %v798 = vsel %vm797, %v790, %v794
        %v799 = vand.u32 2147483647, %v788
        %vm800 = vcmp.eq.f32.partialorder %v799, 8.507059e+37
        %v801 = vand.u32 %v788, 2147483648
        %v802 = vor.u32 1.1754944e-38, %v801
        %v803 = vsel %vm800, %v802, %v798
        %v804 = vmul.f32 1.0, %v803
        %v805 = vrcp.pop %v789
        %v806 = vmul.f32 %v789, %v805
        %v807 = vsub.f32 1.0, %v806
        %v808 = vmul.f32 %v805, %v807
        %v809 = vadd.f32 %v805, %v808
        %vm810 = vweird.f32 %v789
        %vm811 = vweird.f32 %v805
        %vm812 = vmor %vm810, %vm811
        %v813 = vsel %vm812, %v805, %v809
        %v814 = vand.u32 2147483647, %v789
        %vm815 = vcmp.eq.f32.partialorder %v814, 8.507059e+37
        %v816 = vand.u32 %v789, 2147483648
        %v817 = vor.u32 1.1754944e-38, %v816
        %v818 = vsel %vm815, %v817, %v813
        %v819 = vmul.f32 1.0, %v818
        %820 = vxpose.xlu0.b32.start [1/16] %v356, 128
        %821 = vxpose.xlu0.b32.cont [2/16] %v371, 128
        %822 = vxpose.xlu0.b32.cont [3/16] 0.0, 128
        %823 = vxpose.xlu0.b32.cont [4/16] 0.0, 128
        %824 = vxpose.xlu0.b32.cont [5/16] 0.0, 128
        %825 = vxpose.xlu0.b32.cont [6/16] 0.0, 128
        %826 = vxpose.xlu0.b32.cont [7/16] 0.0, 128
        %827 = vxpose.xlu0.b32.cont [8/16] 0.0, 128
        %828 = vxpose.xlu0.b32.cont [9/16] 0.0, 128
        %829 = vxpose.xlu0.b32.cont [10/16] 0.0, 128
        %830 = vxpose.xlu0.b32.cont [11/16] 0.0, 128
        %831 = vxpose.xlu0.b32.cont [12/16] 0.0, 128
        %832 = vxpose.xlu0.b32.cont [13/16] 0.0, 128
        %833 = vxpose.xlu0.b32.cont [14/16] 0.0, 128
        %834 = vxpose.xlu0.b32.cont [15/16] 0.0, 128
        %835 = vxpose.xlu0.b32.end [16/16] 0.0, 128
        %v836 = vpop.trf.xlu0
        %v837 = vpop.trf.xlu0
        %v838 = vpop.trf.xlu0
        %v839 = vpop.trf.xlu0
        %v840 = vpop.trf.xlu0
        %v841 = vpop.trf.xlu0
        %v842 = vpop.trf.xlu0
        %v843 = vpop.trf.xlu0
        %v844 = vpop.trf.xlu0
        %v845 = vpop.trf.xlu0
        %v846 = vpop.trf.xlu0
        %v847 = vpop.trf.xlu0
        %v848 = vpop.trf.xlu0
        %v849 = vpop.trf.xlu0
        %v850 = vpop.trf.xlu0
        %v851 = vpop.trf.xlu0
        %vm852 = vcmask 130048
        %v854 = vsel %vm852, %v836, 0
        %v857 = vsel %vm852, %v837, 0
        %859 = vmatpush.msra.mxu0 0.0
        %860 = vmatpush.msra.mxu0 0.0
        %861 = vmatpush.msra.mxu0 0.0
        %862 = vmatpush.msra.mxu0 0.0
        %863 = vmatpush.msra.mxu0 0.0
        %864 = vmatpush.msra.mxu0 0.0
        %865 = vmatpush.msra.mxu0 0.0
        %866 = vmatpush.msra.mxu0 0.0
        %867 = vmatpush.msra.mxu0 0.0
        %868 = vmatpush.msra.mxu0 0.0
        %869 = vmatpush.msra.mxu0 0.0
        %870 = vmatpush.msra.mxu0 0.0
        %871 = vmatpush.msra.mxu0 0.0
        %872 = vmatpush.msra.mxu0 0.0
        %873 = vmatpush.msra.mxu0 %v627
        %874 = vmatpush.msra.mxu0 %v612
        %875 = vmatmul.f32.gmra.mxu0 %v854
        %v876 = vpop.f32.mrf.mxu0
        %v877 = vadd.f32 0.0, %v876
        %878 = vmatmul.f32.gmra.mxu0 %v857
        %v879 = vpop.f32.mrf.mxu0
        %v880 = vadd.f32 0.0, %v879
        %881 = vdwg.mxu0
        %v883 = vsel %vm852, %v297, 0
        %v886 = vsel %vm852, %v298, 0
        %888 = vmatpush.msra.mxu0 0.0
        %889 = vmatpush.msra.mxu0 0.0
        %890 = vmatpush.msra.mxu0 0.0
        %891 = vmatpush.msra.mxu0 0.0
        %892 = vmatpush.msra.mxu0 0.0
        %893 = vmatpush.msra.mxu0 0.0
        %894 = vmatpush.msra.mxu0 0.0
        %895 = vmatpush.msra.mxu0 0.0
        %896 = vmatpush.msra.mxu0 0.0
        %897 = vmatpush.msra.mxu0 0.0
        %898 = vmatpush.msra.mxu0 0.0
        %899 = vmatpush.msra.mxu0 0.0
        %900 = vmatpush.msra.mxu0 0.0
        %901 = vmatpush.msra.mxu0 0.0
        %902 = vmatpush.msra.mxu0 %v880
        %903 = vmatpush.msra.mxu0 %v877
        %904 = vmatmul.f32.gmra.mxu0 %v883
        %v905 = vpop.f32.mrf.mxu0
        %v906 = vadd.f32 0.0, %v905
        %907 = vmatmul.f32.gmra.mxu0 %v886
        %v908 = vpop.f32.mrf.mxu0
        %v909 = vadd.f32 0.0, %v908
        %910 = vdwg.mxu0
        %911 = vxpose.xlu0.b32.start [1/16] %v420, 128
        %912 = vxpose.xlu0.b32.cont [2/16] %v435, 128
        %913 = vxpose.xlu0.b32.cont [3/16] 0.0, 128
        %914 = vxpose.xlu0.b32.cont [4/16] 0.0, 128
        %915 = vxpose.xlu0.b32.cont [5/16] 0.0, 128
        %916 = vxpose.xlu0.b32.cont [6/16] 0.0, 128
        %917 = vxpose.xlu0.b32.cont [7/16] 0.0, 128
        %918 = vxpose.xlu0.b32.cont [8/16] 0.0, 128
        %919 = vxpose.xlu0.b32.cont [9/16] 0.0, 128
        %920 = vxpose.xlu0.b32.cont [10/16] 0.0, 128
        %921 = vxpose.xlu0.b32.cont [11/16] 0.0, 128
        %922 = vxpose.xlu0.b32.cont [12/16] 0.0, 128
        %923 = vxpose.xlu0.b32.cont [13/16] 0.0, 128
        %924 = vxpose.xlu0.b32.cont [14/16] 0.0, 128
        %925 = vxpose.xlu0.b32.cont [15/16] 0.0, 128
        %926 = vxpose.xlu0.b32.end [16/16] 0.0, 128
        %v927 = vpop.trf.xlu0
        %v928 = vpop.trf.xlu0
        %v929 = vpop.trf.xlu0
        %v930 = vpop.trf.xlu0
        %v931 = vpop.trf.xlu0
        %v932 = vpop.trf.xlu0
        %v933 = vpop.trf.xlu0
        %v934 = vpop.trf.xlu0
        %v935 = vpop.trf.xlu0
        %v936 = vpop.trf.xlu0
        %v937 = vpop.trf.xlu0
        %v938 = vpop.trf.xlu0
        %v939 = vpop.trf.xlu0
        %v940 = vpop.trf.xlu0
        %v941 = vpop.trf.xlu0
        %v942 = vpop.trf.xlu0
        %v944 = vsel %vm852, %v927, 0
        %v947 = vsel %vm852, %v928, 0
        %949 = vmatpush.msra.mxu0 0.0
        %950 = vmatpush.msra.mxu0 0.0
        %951 = vmatpush.msra.mxu0 0.0
        %952 = vmatpush.msra.mxu0 0.0
        %953 = vmatpush.msra.mxu0 0.0
        %954 = vmatpush.msra.mxu0 0.0
        %955 = vmatpush.msra.mxu0 0.0
        %956 = vmatpush.msra.mxu0 0.0
        %957 = vmatpush.msra.mxu0 0.0
        %958 = vmatpush.msra.mxu0 0.0
        %959 = vmatpush.msra.mxu0 0.0
        %960 = vmatpush.msra.mxu0 0.0
        %961 = vmatpush.msra.mxu0 0.0
        %962 = vmatpush.msra.mxu0 0.0
        %963 = vmatpush.msra.mxu0 %v691
        %964 = vmatpush.msra.mxu0 %v676
        %965 = vmatmul.f32.gmra.mxu0 %v944
        %v966 = vpop.f32.mrf.mxu0
        %v967 = vadd.f32 0.0, %v966
        %968 = vmatmul.f32.gmra.mxu0 %v947
        %v969 = vpop.f32.mrf.mxu0
        %v970 = vadd.f32 0.0, %v969
        %971 = vdwg.mxu0
        %v973 = vsel %vm852, %v300, 0
        %v976 = vsel %vm852, %v301, 0
        %978 = vmatpush.msra.mxu0 0.0
        %979 = vmatpush.msra.mxu0 0.0
        %980 = vmatpush.msra.mxu0 0.0
        %981 = vmatpush.msra.mxu0 0.0
        %982 = vmatpush.msra.mxu0 0.0
        %983 = vmatpush.msra.mxu0 0.0
        %984 = vmatpush.msra.mxu0 0.0
        %985 = vmatpush.msra.mxu0 0.0
        %986 = vmatpush.msra.mxu0 0.0
        %987 = vmatpush.msra.mxu0 0.0
        %988 = vmatpush.msra.mxu0 0.0
        %989 = vmatpush.msra.mxu0 0.0
        %990 = vmatpush.msra.mxu0 0.0
        %991 = vmatpush.msra.mxu0 0.0
        %992 = vmatpush.msra.mxu0 %v970
        %993 = vmatpush.msra.mxu0 %v967
        %994 = vmatmul.f32.gmra.mxu0 %v973
        %v995 = vpop.f32.mrf.mxu0
        %v996 = vadd.f32 0.0, %v995
        %997 = vmatmul.f32.gmra.mxu0 %v976
        %v998 = vpop.f32.mrf.mxu0
        %v999 = vadd.f32 0.0, %v998
        %1000 = vdwg.mxu0
        %1001 = vxpose.xlu0.b32.start [1/16] %v484, 128
        %1002 = vxpose.xlu0.b32.cont [2/16] %v499, 128
        %1003 = vxpose.xlu0.b32.cont [3/16] 0.0, 128
        %1004 = vxpose.xlu0.b32.cont [4/16] 0.0, 128
        %1005 = vxpose.xlu0.b32.cont [5/16] 0.0, 128
        %1006 = vxpose.xlu0.b32.cont [6/16] 0.0, 128
        %1007 = vxpose.xlu0.b32.cont [7/16] 0.0, 128
        %1008 = vxpose.xlu0.b32.cont [8/16] 0.0, 128
        %1009 = vxpose.xlu0.b32.cont [9/16] 0.0, 128
        %1010 = vxpose.xlu0.b32.cont [10/16] 0.0, 128
        %1011 = vxpose.xlu0.b32.cont [11/16] 0.0, 128
        %1012 = vxpose.xlu0.b32.cont [12/16] 0.0, 128
        %1013 = vxpose.xlu0.b32.cont [13/16] 0.0, 128
        %1014 = vxpose.xlu0.b32.cont [14/16] 0.0, 128
        %1015 = vxpose.xlu0.b32.cont [15/16] 0.0, 128
        %1016 = vxpose.xlu0.b32.end [16/16] 0.0, 128
        %v1017 = vpop.trf.xlu0
        %v1018 = vpop.trf.xlu0
        %v1019 = vpop.trf.xlu0
        %v1020 = vpop.trf.xlu0
        %v1021 = vpop.trf.xlu0
        %v1022 = vpop.trf.xlu0
        %v1023 = vpop.trf.xlu0
        %v1024 = vpop.trf.xlu0
        %v1025 = vpop.trf.xlu0
        %v1026 = vpop.trf.xlu0
        %v1027 = vpop.trf.xlu0
        %v1028 = vpop.trf.xlu0
        %v1029 = vpop.trf.xlu0
        %v1030 = vpop.trf.xlu0
        %v1031 = vpop.trf.xlu0
        %v1032 = vpop.trf.xlu0
        %v1034 = vsel %vm852, %v1017, 0
        %v1037 = vsel %vm852, %v1018, 0
        %1039 = vmatpush.msra.mxu0 0.0
        %1040 = vmatpush.msra.mxu0 0.0
        %1041 = vmatpush.msra.mxu0 0.0
        %1042 = vmatpush.msra.mxu0 0.0
        %1043 = vmatpush.msra.mxu0 0.0
        %1044 = vmatpush.msra.mxu0 0.0
        %1045 = vmatpush.msra.mxu0 0.0
        %1046 = vmatpush.msra.mxu0 0.0
        %1047 = vmatpush.msra.mxu0 0.0
        %1048 = vmatpush.msra.mxu0 0.0
        %1049 = vmatpush.msra.mxu0 0.0
        %1050 = vmatpush.msra.mxu0 0.0
        %1051 = vmatpush.msra.mxu0 0.0
        %1052 = vmatpush.msra.mxu0 0.0
        %1053 = vmatpush.msra.mxu0 %v755
        %1054 = vmatpush.msra.mxu0 %v740
        %1055 = vmatmul.f32.gmra.mxu0 %v1034
        %v1056 = vpop.f32.mrf.mxu0
        %v1057 = vadd.f32 0.0, %v1056
        %1058 = vmatmul.f32.gmra.mxu0 %v1037
        %v1059 = vpop.f32.mrf.mxu0
        %v1060 = vadd.f32 0.0, %v1059
        %1061 = vdwg.mxu0
        %v1063 = vsel %vm852, %v303, 0
        %v1066 = vsel %vm852, %v304, 0
        %1068 = vmatpush.msra.mxu0 0.0
        %1069 = vmatpush.msra.mxu0 0.0
        %1070 = vmatpush.msra.mxu0 0.0
        %1071 = vmatpush.msra.mxu0 0.0
        %1072 = vmatpush.msra.mxu0 0.0
        %1073 = vmatpush.msra.mxu0 0.0
        %1074 = vmatpush.msra.mxu0 0.0
        %1075 = vmatpush.msra.mxu0 0.0
        %1076 = vmatpush.msra.mxu0 0.0
        %1077 = vmatpush.msra.mxu0 0.0
        %1078 = vmatpush.msra.mxu0 0.0
        %1079 = vmatpush.msra.mxu0 0.0
        %1080 = vmatpush.msra.mxu0 0.0
        %1081 = vmatpush.msra.mxu0 0.0
        %1082 = vmatpush.msra.mxu0 %v1060
        %1083 = vmatpush.msra.mxu0 %v1057
        %1084 = vmatmul.f32.gmra.mxu0 %v1063
        %v1085 = vpop.f32.mrf.mxu0
        %v1086 = vadd.f32 0.0, %v1085
        %1087 = vmatmul.f32.gmra.mxu0 %v1066
        %v1088 = vpop.f32.mrf.mxu0
        %v1089 = vadd.f32 0.0, %v1088
        %1090 = vdwg.mxu0
        %1091 = vxpose.xlu0.b32.start [1/16] %v548, 128
        %1092 = vxpose.xlu0.b32.cont [2/16] %v563, 128
        %1093 = vxpose.xlu0.b32.cont [3/16] 0.0, 128
        %1094 = vxpose.xlu0.b32.cont [4/16] 0.0, 128
        %1095 = vxpose.xlu0.b32.cont [5/16] 0.0, 128
        %1096 = vxpose.xlu0.b32.cont [6/16] 0.0, 128
        %1097 = vxpose.xlu0.b32.cont [7/16] 0.0, 128
        %1098 = vxpose.xlu0.b32.cont [8/16] 0.0, 128
        %1099 = vxpose.xlu0.b32.cont [9/16] 0.0, 128
        %1100 = vxpose.xlu0.b32.cont [10/16] 0.0, 128
        %1101 = vxpose.xlu0.b32.cont [11/16] 0.0, 128
        %1102 = vxpose.xlu0.b32.cont [12/16] 0.0, 128
        %1103 = vxpose.xlu0.b32.cont [13/16] 0.0, 128
        %1104 = vxpose.xlu0.b32.cont [14/16] 0.0, 128
        %1105 = vxpose.xlu0.b32.cont [15/16] 0.0, 128
        %1106 = vxpose.xlu0.b32.end [16/16] 0.0, 128
        %v1107 = vpop.trf.xlu0
        %v1108 = vpop.trf.xlu0
        %v1109 = vpop.trf.xlu0
        %v1110 = vpop.trf.xlu0
        %v1111 = vpop.trf.xlu0
        %v1112 = vpop.trf.xlu0
        %v1113 = vpop.trf.xlu0
        %v1114 = vpop.trf.xlu0
        %v1115 = vpop.trf.xlu0
        %v1116 = vpop.trf.xlu0
        %v1117 = vpop.trf.xlu0
        %v1118 = vpop.trf.xlu0
        %v1119 = vpop.trf.xlu0
        %v1120 = vpop.trf.xlu0
        %v1121 = vpop.trf.xlu0
        %v1122 = vpop.trf.xlu0
        %v1124 = vsel %vm852, %v1107, 0
        %v1127 = vsel %vm852, %v1108, 0
        %1129 = vmatpush.msra.mxu0 0.0
        %1130 = vmatpush.msra.mxu0 0.0
        %1131 = vmatpush.msra.mxu0 0.0
        %1132 = vmatpush.msra.mxu0 0.0
        %1133 = vmatpush.msra.mxu0 0.0
        %1134 = vmatpush.msra.mxu0 0.0
        %1135 = vmatpush.msra.mxu0 0.0
        %1136 = vmatpush.msra.mxu0 0.0
        %1137 = vmatpush.msra.mxu0 0.0
        %1138 = vmatpush.msra.mxu0 0.0
        %1139 = vmatpush.msra.mxu0 0.0
        %1140 = vmatpush.msra.mxu0 0.0
        %1141 = vmatpush.msra.mxu0 0.0
        %1142 = vmatpush.msra.mxu0 0.0
        %1143 = vmatpush.msra.mxu0 %v819
        %1144 = vmatpush.msra.mxu0 %v804
        %1145 = vmatmul.f32.gmra.mxu0 %v1124
        %v1146 = vpop.f32.mrf.mxu0
        %v1147 = vadd.f32 0.0, %v1146
        %1148 = vmatmul.f32.gmra.mxu0 %v1127
        %v1149 = vpop.f32.mrf.mxu0
        %v1150 = vadd.f32 0.0, %v1149
        %1151 = vdwg.mxu0
        %v1153 = vsel %vm852, %v306, 0
        %v1156 = vsel %vm852, %v307, 0
        %1158 = vmatpush.msra.mxu0 0.0
        %1159 = vmatpush.msra.mxu0 0.0
        %1160 = vmatpush.msra.mxu0 0.0
        %1161 = vmatpush.msra.mxu0 0.0
        %1162 = vmatpush.msra.mxu0 0.0
        %1163 = vmatpush.msra.mxu0 0.0
        %1164 = vmatpush.msra.mxu0 0.0
        %1165 = vmatpush.msra.mxu0 0.0
        %1166 = vmatpush.msra.mxu0 0.0
        %1167 = vmatpush.msra.mxu0 0.0
        %1168 = vmatpush.msra.mxu0 0.0
        %1169 = vmatpush.msra.mxu0 0.0
        %1170 = vmatpush.msra.mxu0 0.0
        %1171 = vmatpush.msra.mxu0 0.0
        %1172 = vmatpush.msra.mxu0 %v1150
        %1173 = vmatpush.msra.mxu0 %v1147
        %1174 = vmatmul.f32.gmra.mxu0 %v1153
        %v1175 = vpop.f32.mrf.mxu0
        %v1176 = vadd.f32 0.0, %v1175
        %1177 = vmatmul.f32.gmra.mxu0 %v1156
        %v1178 = vpop.f32.mrf.mxu0
        %v1179 = vadd.f32 0.0, %v1178
        %1180 = vdwg.mxu0
        %s1181 = sld [smem:[#allocation9]]
        %v1182 = vstv %s1181
        %v1183 = vmul.f32 %v1182, %v906
        %v1184 = vmul.f32 %v1182, %v909
        %s1185 = sld [smem:[#allocation9 + $0x1]]
        %v1186 = vstv %s1185
        %v1187 = vmul.f32 %v1186, %v996
        %v1188 = vmul.f32 %v1186, %v999
        %v1189 = vadd.f32 %v1183, %v1187
        %v1190 = vadd.f32 %v1184, %v1188
        %s1191 = sld [smem:[#allocation9 + $0x2]]
        %v1192 = vstv %s1191
        %v1193 = vmul.f32 %v1192, %v1086
        %v1194 = vmul.f32 %v1192, %v1089
        %v1195 = vadd.f32 %v1189, %v1193
        %v1196 = vadd.f32 %v1190, %v1194
        %s1197 = sld [smem:[#allocation9 + $0x3]]
        %v1198 = vstv %s1197
        %v1199 = vmul.f32 %v1198, %v1176
        %v1200 = vmul.f32 %v1198, %v1179
        %v1201 = vadd.f32 %v1195, %v1199
        %v1202 = vadd.f32 %v1196, %v1200
        %s1203 = sld [smem:[#allocation10]]
        %v1204 = vstv %s1203
        %v1205 = vadd.f32 %v1201, %v1204
        %v1206 = vadd.f32 %v1202, %v1204
        %v1207 = vsub.f32 0.0, %v1205
        %v1208 = vsub.f32 0.0, %v1206
        %v1209 = vmul.f32 %v1207, 1.442695
        %v1210 = vpow.pop %v1209
        %v1211 = vmul.f32 %v1208, 1.442695
        %v1212 = vpow.pop %v1211
        %v1213 = vadd.f32 %v1210, 1.0
        %v1214 = vadd.f32 %v1212, 1.0
        %v1215 = vrcp.pop %v1213
        %v1216 = vmul.f32 %v1213, %v1215
        %v1217 = vsub.f32 1.0, %v1216
        %v1218 = vmul.f32 %v1215, %v1217
        %v1219 = vadd.f32 %v1215, %v1218
        %vm1220 = vweird.f32 %v1213
        %vm1221 = vweird.f32 %v1215
        %vm1222 = vmor %vm1220, %vm1221
        %v1223 = vsel %vm1222, %v1215, %v1219
        %v1224 = vand.u32 2147483647, %v1213
        %vm1225 = vcmp.eq.f32.partialorder %v1224, 8.507059e+37
        %v1226 = vand.u32 %v1213, 2147483648
        %v1227 = vor.u32 1.1754944e-38, %v1226
        %v1228 = vsel %vm1225, %v1227, %v1223
        %v1229 = vmul.f32 1.0, %v1228
        %v1230 = vrcp.pop %v1214
        %v1231 = vmul.f32 %v1214, %v1230
        %v1232 = vsub.f32 1.0, %v1231
        %v1233 = vmul.f32 %v1230, %v1232
        %v1234 = vadd.f32 %v1230, %v1233
        %vm1235 = vweird.f32 %v1214
        %vm1236 = vweird.f32 %v1230
        %vm1237 = vmor %vm1235, %vm1236
        %v1238 = vsel %vm1237, %v1230, %v1234
        %v1239 = vand.u32 2147483647, %v1214
        %vm1240 = vcmp.eq.f32.partialorder %v1239, 8.507059e+37
        %v1241 = vand.u32 %v1214, 2147483648
        %v1242 = vor.u32 1.1754944e-38, %v1241
        %v1243 = vsel %vm1240, %v1242, %v1238
        %v1244 = vmul.f32 1.0, %v1243
        %1245 = vst.msk [vmem:[%s296] sm:$0xff] %vm852, %v1229
        %1246 = vst.msk [vmem:[%s296 + $0x8] sm:$0xff] %vm852, %v1244
        %s1247 = sld [smem:[#allocation9 + $0x80]]
        %v1248 = vstv %s1247
        %v1249 = vmul.f32 %v1248, %v906
        %v1250 = vmul.f32 %v1248, %v909
        %s1251 = sld [smem:[#allocation9 + $0x81]]
        %v1252 = vstv %s1251
        %v1253 = vmul.f32 %v1252, %v996
        %v1254 = vmul.f32 %v1252, %v999
        %v1255 = vadd.f32 %v1249, %v1253
        %v1256 = vadd.f32 %v1250, %v1254
        %s1257 = sld [smem:[#allocation9 + $0x82]]
        %v1258 = vstv %s1257
        %v1259 = vmul.f32 %v1258, %v1086
        %v1260 = vmul.f32 %v1258, %v1089
        %v1261 = vadd.f32 %v1255, %v1259
        %v1262 = vadd.f32 %v1256, %v1260
        %s1263 = sld [smem:[#allocation9 + $0x83]]
        %v1264 = vstv %s1263
        %v1265 = vmul.f32 %v1264, %v1176
        %v1266 = vmul.f32 %v1264, %v1179
        %v1267 = vadd.f32 %v1261, %v1265
        %v1268 = vadd.f32 %v1262, %v1266
        %s1269 = sld [smem:[#allocation10 + $0x1]]
        %v1270 = vstv %s1269
        %v1271 = vadd.f32 %v1267, %v1270
        %v1272 = vadd.f32 %v1268, %v1270
        %v1273 = vsub.f32 0.0, %v1271
        %v1274 = vsub.f32 0.0, %v1272
        %v1275 = vmul.f32 %v1273, 1.442695
        %v1276 = vpow.pop %v1275
        %v1277 = vmul.f32 %v1274, 1.442695
        %v1278 = vpow.pop %v1277
        %v1279 = vadd.f32 %v1276, 1.0
        %v1280 = vadd.f32 %v1278, 1.0
        %v1281 = vrcp.pop %v1279
        %v1282 = vmul.f32 %v1279, %v1281
        %v1283 = vsub.f32 1.0, %v1282
        %v1284 = vmul.f32 %v1281, %v1283
        %v1285 = vadd.f32 %v1281, %v1284
        %vm1286 = vweird.f32 %v1279
        %vm1287 = vweird.f32 %v1281
        %vm1288 = vmor %vm1286, %vm1287
        %v1289 = vsel %vm1288, %v1281, %v1285
        %v1290 = vand.u32 2147483647, %v1279
        %vm1291 = vcmp.eq.f32.partialorder %v1290, 8.507059e+37
        %v1292 = vand.u32 %v1279, 2147483648
        %v1293 = vor.u32 1.1754944e-38, %v1292
        %v1294 = vsel %vm1291, %v1293, %v1289
        %v1295 = vmul.f32 1.0, %v1294
        %v1296 = vrcp.pop %v1280
        %v1297 = vmul.f32 %v1280, %v1296
        %v1298 = vsub.f32 1.0, %v1297
        %v1299 = vmul.f32 %v1296, %v1298
        %v1300 = vadd.f32 %v1296, %v1299
        %vm1301 = vweird.f32 %v1280
        %vm1302 = vweird.f32 %v1296
        %vm1303 = vmor %vm1301, %vm1302
        %v1304 = vsel %vm1303, %v1296, %v1300
        %v1305 = vand.u32 2147483647, %v1280
        %vm1306 = vcmp.eq.f32.partialorder %v1305, 8.507059e+37
        %v1307 = vand.u32 %v1280, 2147483648
        %v1308 = vor.u32 1.1754944e-38, %v1307
        %v1309 = vsel %vm1306, %v1308, %v1304
        %v1310 = vmul.f32 1.0, %v1309
        %s1311 = scalar_lea.vmem %s296, 16 [#allocation12]
        %1312 = vst.msk [vmem:[%s1311] sm:$0xff] %vm852, %v1295
        %1313 = vst.msk [vmem:[%s1311 + $0x8] sm:$0xff] %vm852, %v1310
        %s1314 = sld [smem:[#allocation9 + $0x100]]
        %v1315 = vstv %s1314
        %v1316 = vmul.f32 %v1315, %v906
        %v1317 = vmul.f32 %v1315, %v909
        %s1318 = sld [smem:[#allocation9 + $0x101]]
        %v1319 = vstv %s1318
        %v1320 = vmul.f32 %v1319, %v996
        %v1321 = vmul.f32 %v1319, %v999
        %v1322 = vadd.f32 %v1316, %v1320
        %v1323 = vadd.f32 %v1317, %v1321
        %s1324 = sld [smem:[#allocation9 + $0x102]]
        %v1325 = vstv %s1324
        %v1326 = vmul.f32 %v1325, %v1086
        %v1327 = vmul.f32 %v1325, %v1089
        %v1328 = vadd.f32 %v1322, %v1326
        %v1329 = vadd.f32 %v1323, %v1327
        %s1330 = sld [smem:[#allocation9 + $0x103]]
        %v1331 = vstv %s1330
        %v1332 = vmul.f32 %v1331, %v1176
        %v1333 = vmul.f32 %v1331, %v1179
        %v1334 = vadd.f32 %v1328, %v1332
        %v1335 = vadd.f32 %v1329, %v1333
        %s1336 = sld [smem:[#allocation10 + $0x2]]
        %v1337 = vstv %s1336
        %v1338 = vadd.f32 %v1334, %v1337
        %v1339 = vadd.f32 %v1335, %v1337
        %v1340 = vsub.f32 0.0, %v1338
        %v1341 = vsub.f32 0.0, %v1339
        %v1342 = vmul.f32 %v1340, 1.442695
        %v1343 = vpow.pop %v1342
        %v1344 = vmul.f32 %v1341, 1.442695
        %v1345 = vpow.pop %v1344
        %v1346 = vadd.f32 %v1343, 1.0
        %v1347 = vadd.f32 %v1345, 1.0
        %v1348 = vrcp.pop %v1346
        %v1349 = vmul.f32 %v1346, %v1348
        %v1350 = vsub.f32 1.0, %v1349
        %v1351 = vmul.f32 %v1348, %v1350
        %v1352 = vadd.f32 %v1348, %v1351
        %vm1353 = vweird.f32 %v1346
        %vm1354 = vweird.f32 %v1348
        %vm1355 = vmor %vm1353, %vm1354
        %v1356 = vsel %vm1355, %v1348, %v1352
        %v1357 = vand.u32 2147483647, %v1346
        %vm1358 = vcmp.eq.f32.partialorder %v1357, 8.507059e+37
        %v1359 = vand.u32 %v1346, 2147483648
        %v1360 = vor.u32 1.1754944e-38, %v1359
        %v1361 = vsel %vm1358, %v1360, %v1356
        %v1362 = vmul.f32 1.0, %v1361
        %v1363 = vrcp.pop %v1347
        %v1364 = vmul.f32 %v1347, %v1363
        %v1365 = vsub.f32 1.0, %v1364
        %v1366 = vmul.f32 %v1363, %v1365
        %v1367 = vadd.f32 %v1363, %v1366
        %vm1368 = vweird.f32 %v1347
        %vm1369 = vweird.f32 %v1363
        %vm1370 = vmor %vm1368, %vm1369
        %v1371 = vsel %vm1370, %v1363, %v1367
        %v1372 = vand.u32 2147483647, %v1347
        %vm1373 = vcmp.eq.f32.partialorder %v1372, 8.507059e+37
        %v1374 = vand.u32 %v1347, 2147483648
        %v1375 = vor.u32 1.1754944e-38, %v1374
        %v1376 = vsel %vm1373, %v1375, %v1371
        %v1377 = vmul.f32 1.0, %v1376
        %s1378 = scalar_lea.vmem %s296, 32 [#allocation12]
        %1379 = vst.msk [vmem:[%s1378] sm:$0xff] %vm852, %v1362
        %1380 = vst.msk [vmem:[%s1378 + $0x8] sm:$0xff] %vm852, %v1377
        %s1381 = sld [smem:[#allocation9 + $0x180]]
        %v1382 = vstv %s1381
        %v1383 = vmul.f32 %v1382, %v906
        %v1384 = vmul.f32 %v1382, %v909
        %s1385 = sld [smem:[#allocation9 + $0x181]]
        %v1386 = vstv %s1385
        %v1387 = vmul.f32 %v1386, %v996
        %v1388 = vmul.f32 %v1386, %v999
        %v1389 = vadd.f32 %v1383, %v1387
        %v1390 = vadd.f32 %v1384, %v1388
        %s1391 = sld [smem:[#allocation9 + $0x182]]
        %v1392 = vstv %s1391
        %v1393 = vmul.f32 %v1392, %v1086
        %v1394 = vmul.f32 %v1392, %v1089
        %v1395 = vadd.f32 %v1389, %v1393
        %v1396 = vadd.f32 %v1390, %v1394
        %s1397 = sld [smem:[#allocation9 + $0x183]]
        %v1398 = vstv %s1397
        %v1399 = vmul.f32 %v1398, %v1176
        %v1400 = vmul.f32 %v1398, %v1179
        %v1401 = vadd.f32 %v1395, %v1399
        %v1402 = vadd.f32 %v1396, %v1400
        %s1403 = sld [smem:[#allocation10 + $0x3]]
        %v1404 = vstv %s1403
        %v1405 = vadd.f32 %v1401, %v1404
        %v1406 = vadd.f32 %v1402, %v1404
        %v1407 = vsub.f32 0.0, %v1405
        %v1408 = vsub.f32 0.0, %v1406
        %v1409 = vmul.f32 %v1407, 1.442695
        %v1410 = vpow.pop %v1409
        %v1411 = vmul.f32 %v1408, 1.442695
        %v1412 = vpow.pop %v1411
        %v1413 = vadd.f32 %v1410, 1.0
        %v1414 = vadd.f32 %v1412, 1.0
        %v1415 = vrcp.pop %v1413
        %v1416 = vmul.f32 %v1413, %v1415
        %v1417 = vsub.f32 1.0, %v1416
        %v1418 = vmul.f32 %v1415, %v1417
        %v1419 = vadd.f32 %v1415, %v1418
        %vm1420 = vweird.f32 %v1413
        %vm1421 = vweird.f32 %v1415
        %vm1422 = vmor %vm1420, %vm1421
        %v1423 = vsel %vm1422, %v1415, %v1419
        %v1424 = vand.u32 2147483647, %v1413
        %vm1425 = vcmp.eq.f32.partialorder %v1424, 8.507059e+37
        %v1426 = vand.u32 %v1413, 2147483648
        %v1427 = vor.u32 1.1754944e-38, %v1426
        %v1428 = vsel %vm1425, %v1427, %v1423
        %v1429 = vmul.f32 1.0, %v1428
        %v1430 = vrcp.pop %v1414
        %v1431 = vmul.f32 %v1414, %v1430
        %v1432 = vsub.f32 1.0, %v1431
        %v1433 = vmul.f32 %v1430, %v1432
        %v1434 = vadd.f32 %v1430, %v1433
        %vm1435 = vweird.f32 %v1414
        %vm1436 = vweird.f32 %v1430
        %vm1437 = vmor %vm1435, %vm1436
        %v1438 = vsel %vm1437, %v1430, %v1434
        %v1439 = vand.u32 2147483647, %v1414
        %vm1440 = vcmp.eq.f32.partialorder %v1439, 8.507059e+37
        %v1441 = vand.u32 %v1414, 2147483648
        %v1442 = vor.u32 1.1754944e-38, %v1441
        %v1443 = vsel %vm1440, %v1442, %v1438
        %v1444 = vmul.f32 1.0, %v1443
        %s1445 = scalar_lea.vmem %s296, 48 [#allocation12]
        %1446 = vst.msk [vmem:[%s1445] sm:$0xff] %vm852, %v1429
        %1447 = vst.msk [vmem:[%s1445 + $0x8] sm:$0xff] %vm852, %v1444
        %s1448 = sand.u32 %s143, 1
        %s1449 = scalar_lea.sflag [#allocation4], %s1448
        %s1450 = sand.u32 %s143, 1
        %s1451 = smul.addr %s1450, 64
        %s1452 = scalar_lea.vmem [#allocation12], %s1451
        // Predicated region
        $region61: #{tpu_custom_call.1} parent=39 // pred_check
          %p1453 = pneg %p153
        $region62: #{tpu_custom_call.1} parent=39 // pred_check_branch
          %1455 = sbr.rel (%p1453) target = $region64
        $region63: #{tpu_custom_call.1} parent=39 // pred_region
          %1457 = vsyncadd %s1449, 0
          %s1458 = smul.addr %s25, 8
          %s1459 = smul.addr %s1458, 8
          %s1460 = scalar_lea.hbm %s5, %s1459
          %s1461 = sshll.u32 %s1452, 4
          %s1462 = int_to_ptr.vmem [resolvable:$true] %s1461
          %s1463 = sshll.u32 %s1460, 4
          %s1464 = int_to_ptr.hbm [resolvable:$true] %s1463
          %1469 = dma.vmem_to_hbm [thread:$0]  %s1462, 1024, %s1464, %s1449, 128, 128, 8
        $region64: #{tpu_custom_call.1} parent=39 // pred_fallthru
          _
      $region40: #{tpu_custom_call.1} parent=5 // pred_fallthru
        _
      %p1470 = scmp.le.s32.totalorder 2, %s20
      // Predicated region
      $region65: #{tpu_custom_call.1} parent=5 // pred_check
        %p1471 = pneg %p1470
      $region66: #{tpu_custom_call.1} parent=5 // pred_check_branch
        %1473 = sbr.rel (%p1471) target = $region68
      $region67: #{tpu_custom_call.1} parent=5 // pred_region
        %s1474 = ssub.s32 %s20, 2
        // Predicated region
        $region69: #{tpu_custom_call.1} parent=67 // pred_check
          %p1475 = pneg %p159
        $region70: #{tpu_custom_call.1} parent=67 // pred_check_branch
          %1477 = sbr.rel (%p1475) target = $region72
        $region71: #{tpu_custom_call.1} parent=67 // pred_region
          %s1478 = sand.u32 %s144, 1
          %s1479 = scalar_lea.sflag [#allocation4], %s1478
          %s1480 = sand.u32 %s144, 1
          %s1481 = smul.addr %s1480, 64
          %s1482 = scalar_lea.vmem [#allocation12], %s1481
          %1484 = dma.done %s1479, 1024
        $region72: #{tpu_custom_call.1} parent=67 // pred_fallthru
          _
      $region68: #{tpu_custom_call.1} parent=5 // pred_fallthru
        _
    $region6: #{tpu_custom_call.1} parent=1 // loop_footer
      %s24 = sadd.s32 1, %s20
    $region7: #{tpu_custom_call.1} parent=1 // loop_footer_branch
      %19 = sbr.rel target = $region3
    $region8: #{tpu_custom_call.1} parent=1 // loop_exit
      _
    %1485 = vsyncpa [#allocation3], 1
    %s1486 = scalar_lea.sflag [#allocation3], 1
    %1487 = vsyncpa %s1486, 1
    %1488 = vsyncpa [#allocation4], 1
    %s1489 = scalar_lea.sflag [#allocation4], 1
    %1490 = vsyncpa %s1489, 1
    %1491 = vsyncpa [#allocation5], 1
    %s1492 = scalar_lea.sflag [#allocation5], 1
    %1493 = vsyncpa %s1492, 1
    %1494 = vsyncpa [#allocation8], 1
    %1495 = vsyncpa [#allocation11], 1

</llo_original>
